<compile_context>
chip_gen: v7x
topology: tpu7x:2x2x1
jax: 0.10.0
libtpu: 0.0.40
codegen_flags: <defaults>
</compile_context>

<pallas_src>
import functools

import jax
import jax.numpy as jnp
from jax import lax
from jax.experimental import pallas as pl
from jax.experimental.pallas import tpu as pltpu

START_TAG = "START"
STOP_TAG = "STOP"


# --------------------------------------------------------------------------
# Kernel 1: bidirectional LSTM (1 layer) + hidden2tag linear projection
# --------------------------------------------------------------------------
def bilstm_features_kernel(emb_ref,          # (T*B, E)  f32, rows time-major (t, b)
                           h0_ref, c0_ref,   # (2, B, H) f32  [0]=fwd [1]=bwd
                           wih_f_ref,        # (E, 4H)
                           whh_f_ref,        # (H, 4H)
                           b_f_ref,          # (1, 4H)
                           wih_b_ref,        # (E, 4H)
                           whh_b_ref,        # (H, 4H)
                           b_b_ref,          # (1, 4H)
                           wout_ref,         # (2H, K)
                           bout_ref,         # (1, K)
                           out_ref,          # (B*T, K)  f32, rows batch-major (b, t)
                           *, T, B):
    H = whh_f_ref.shape[0]

    whh_f = whh_f_ref[...]
    whh_b = whh_b_ref[...]

    # ---- hoisted input projections: one big matmul per direction, biases
    #      folded in once (no per-step broadcast) ----
    emb2d = emb_ref[...]                                           # (T*B, E)
    xg_f = (jnp.dot(emb2d, wih_f_ref[...],
                    preferred_element_type=jnp.float32) + b_f_ref[...])  # (T*B, 4H)
    xg_b = (jnp.dot(emb2d, wih_b_ref[...],
                    preferred_element_type=jnp.float32) + b_b_ref[...])  # (T*B, 4H)

    def lstm_gates(pre, c):
        # PyTorch gate order: input, forget, cell(g), output.
        # Full-vector transcendentals (EUP), then cheap static lane slices.
        sig = jax.nn.sigmoid(pre)                                  # (B, 4H)
        th = jnp.tanh(pre)                                         # (B, 4H)
        i = sig[:, 0:H]
        f = sig[:, H:2 * H]
        g = th[:, 2 * H:3 * H]
        o = sig[:, 3 * H:4 * H]
        c_new = f * c + i * g
        h_new = o * jnp.tanh(c_new)
        return h_new, c_new

    hf, cf = h0_ref[0], c0_ref[0]
    hb, cb = h0_ref[1], c0_ref[1]
    hs_f = [None] * T
    hs_b = [None] * T

    # ---- fully-unrolled, interleaved fwd/bwd recurrence ----
    for s in range(T):
        tf_, tb_ = s, T - 1 - s
        pre_f = xg_f[tf_ * B:(tf_ + 1) * B, :] + jnp.dot(
            hf, whh_f, preferred_element_type=jnp.float32)         # (B, 4H)
        pre_b = xg_b[tb_ * B:(tb_ + 1) * B, :] + jnp.dot(
            hb, whh_b, preferred_element_type=jnp.float32)
        hf, cf = lstm_gates(pre_f, cf)
        hb, cb = lstm_gates(pre_b, cb)
        hs_f[tf_] = hf
        hs_b[tb_] = hb

    # ---- hidden2tag: single matmul per direction, batch-major row order so
    #      the output reshapes to (B, T, K) for free in the wrapper ----
    hf_all = jnp.concatenate(
        [hs_f[t][b:b + 1, :] for b in range(B) for t in range(T)], axis=0)  # (B*T, H)
    hb_all = jnp.concatenate(
        [hs_b[t][b:b + 1, :] for b in range(B) for t in range(T)], axis=0)  # (B*T, H)

    out_ref[...] = (jnp.dot(hf_all, wout_ref[0:H, :],
                            preferred_element_type=jnp.float32)
                    + jnp.dot(hb_all, wout_ref[H:2 * H, :],
                              preferred_element_type=jnp.float32)
                    + bout_ref[...])                               # (B*T, K)


def get_lstm_features(emb_2d, h0, c0, params, *, T, B):
    E = emb_2d.shape[1]
    H = params["whh_f"].shape[0]
    K = params["wout"].shape[1]
    kernel = functools.partial(bilstm_features_kernel, T=T, B=B)
    logits_2d = pl.pallas_call(
        kernel,
        out_shape=jax.ShapeDtypeStruct((B * T, K), jnp.float32),
        grid=(1,),
        in_specs=[
            pl.BlockSpec((T * B, E), lambda i: (0, 0)),
            pl.BlockSpec((2, B, H), lambda i: (0, 0, 0)),
            pl.BlockSpec((2, B, H), lambda i: (0, 0, 0)),
            pl.BlockSpec((E, 4 * H), lambda i: (0, 0)),
            pl.BlockSpec((H, 4 * H), lambda i: (0, 0)),
            pl.BlockSpec((1, 4 * H), lambda i: (0, 0)),
            pl.BlockSpec((E, 4 * H), lambda i: (0, 0)),
            pl.BlockSpec((H, 4 * H), lambda i: (0, 0)),
            pl.BlockSpec((1, 4 * H), lambda i: (0, 0)),
            pl.BlockSpec((2 * H, K), lambda i: (0, 0)),
            pl.BlockSpec((1, K), lambda i: (0, 0)),
        ],
        out_specs=pl.BlockSpec((B * T, K), lambda i: (0, 0)),
        compiler_params=pltpu.CompilerParams(
            dimension_semantics=("arbitrary",)),
    )(emb_2d, h0, c0,
      params["wih_f"], params["whh_f"], params["b_f"],
      params["wih_b"], params["whh_b"], params["b_b"],
      params["wout"], params["bout"])
    # free reshape (contiguous, batch-major rows) -> (B, T, K)
    return logits_2d.reshape(B, T, K)


# --------------------------------------------------------------------------
# Kernel 2: CRF "Viterbi" decode (logsumexp-propagated, as in the reference)
# --------------------------------------------------------------------------
def viterbi_kernel(logits_ref,   # (T, K)  f32  (batch dim squeezed)
                   trans_ref,    # (K, K)  f32
                   score_ref,    # (1, 1)  f32  SMEM
                   path_ref,     # (1, T)  i32  SMEM
                   *, start_id, stop_id, T):
    K = logits_ref.shape[-1]
    trans = trans_ref[...]

    lane_k = lax.broadcasted_iota(jnp.int32, (1, K), 1)
    row_idx = lax.broadcasted_iota(jnp.int32, (K, K), 0)

    # alpha starts at -1000 everywhere except START (matches reference)
    alpha = jnp.where(lane_k == start_id, 0.0, -1000.0).astype(jnp.float32)

    # The emission frame is constant along the previous-tag axis, so it is
    # added AFTER the max/argmax/logsumexp reduction -- identical result.
    bts = [None] * T
    for t in range(T):
        smat = jnp.transpose(alpha) + trans                         # (K, K)
        vmax = jnp.max(smat, axis=0, keepdims=True)                 # (1, K)
        # first-occurrence argmax over previous-tag axis
        bts[t] = jnp.min(jnp.where(smat == vmax, row_idx, K),
                         axis=0, keepdims=True).astype(jnp.int32)   # (1, K)
        frame = logits_ref[pl.ds(t, 1), :]                          # (1, K)
        alpha = (jnp.log(jnp.sum(jnp.exp(smat - vmax), axis=0, keepdims=True))
                 + vmax + frame)

    # transition to STOP
    smat_f = jnp.transpose(alpha) + trans[:, stop_id:stop_id + 1]   # (K, 1)
    vmaxf = jnp.max(smat_f, axis=0, keepdims=True)                  # (1, 1)
    col_idx = lax.broadcasted_iota(jnp.int32, (K, 1), 0)
    best = jnp.min(jnp.where(smat_f == vmaxf, col_idx, K)).astype(jnp.int32)
    lse = jnp.log(jnp.sum(jnp.exp(smat_f - vmaxf), axis=0,
                          keepdims=True)) + vmaxf                   # (1, 1)
    score_ref[0, 0] = lse[0, 0]
    path_ref[0, T - 1] = best

    # backtracking (skips backtrace[0], as in the reference implementation)
    for t in range(T - 2, -1, -1):
        best = jnp.sum(jnp.where(lane_k == best, bts[t + 1], 0)).astype(jnp.int32)
        path_ref[0, t] = best


def viterbi_decode_batch(logits_btk, transitions, start_id, stop_id):
    B, T, K = logits_btk.shape
    kernel = functools.partial(viterbi_kernel,
                               start_id=start_id, stop_id=stop_id, T=T)
    scores, paths = pl.pallas_call(
        kernel,
        out_shape=(jax.ShapeDtypeStruct((B, 1), jnp.float32),
                   jax.ShapeDtypeStruct((B, T), jnp.int32)),
        grid=(B,),
        in_specs=[pl.BlockSpec((None, T, K), lambda b: (b, 0, 0)),
                  pl.BlockSpec((K, K), lambda b: (0, 0))],
        out_specs=(pl.BlockSpec((1, 1), lambda b: (b, 0),
                                memory_space=pltpu.MemorySpace.SMEM),
                   pl.BlockSpec((1, T), lambda b: (b, 0),
                                memory_space=pltpu.MemorySpace.SMEM)),
        compiler_params=pltpu.CompilerParams(
            dimension_semantics=("parallel",)),
    )(logits_btk, transitions)
    return scores[:, 0], paths


# --------------------------------------------------------------------------
# Parameter init (deterministic, synthetic) + forward glue
# --------------------------------------------------------------------------
def init_params(key, vocab, E, H, K, B, tag2id):
    ks = jax.random.split(key, 12)

    def rnd(k, shape, scale=0.1):
        return (scale * jax.random.normal(k, shape)).astype(jnp.float32)

    params = dict(
        emb_table=rnd(ks[0], (vocab, E), 1.0),
        wih_f=rnd(ks[1], (E, 4 * H)),
        whh_f=rnd(ks[2], (H, 4 * H)),
        b_f=rnd(ks[3], (1, 4 * H)),
        wih_b=rnd(ks[4], (E, 4 * H)),
        whh_b=rnd(ks[5], (H, 4 * H)),
        b_b=rnd(ks[6], (1, 4 * H)),
        wout=rnd(ks[7], (2 * H, K)),
        bout=rnd(ks[8], (1, K)),
        h0=rnd(ks[9], (2, B, H), 1.0),
        c0=rnd(ks[10], (2, B, H), 1.0),
    )
    trans = jax.random.normal(ks[11], (K, K)).astype(jnp.float32)
    trans = trans.at[:, tag2id[START_TAG]].set(-1000.0)
    trans = trans.at[tag2id[STOP_TAG], :].set(-1000.0)
    params["transitions"] = trans
    return params


def bilstm_crf_forward(batch_sentences, params, tag2id):
    B, T = batch_sentences.shape
    E = params["emb_table"].shape[1]
    # embedding lookup (gather) stays in plain JAX glue; time-major row order
    emb = jnp.take(params["emb_table"], batch_sentences.T, axis=0)    # (T, B, E)
    emb_2d = emb.reshape(T * B, E).astype(jnp.float32)                # (T*B, E)
    logits = get_lstm_features(emb_2d, params["h0"], params["c0"], params,
                               T=T, B=B)                              # (B, T, K)
    scores, paths = viterbi_decode_batch(
        logits, params["transitions"],
        tag2id[START_TAG], tag2id[STOP_TAG])
    return scores, paths


if __name__ == "__main__":
    tag2id = {"O": 0, "B-ENT": 1, "I-ENT": 2, START_TAG: 3, STOP_TAG: 4}
    B, T, V = 2, 8, 50          # batch, seq_len, vocab
    E, HID = 32, 32             # embedding_dim, hidden_dim
    H = HID // 2                # per-direction LSTM hidden
    K = len(tag2id)

    key = jax.random.PRNGKey(0)
    k_param, k_sent = jax.random.split(key)
    params = init_params(k_param, V, E, H, K, B, tag2id)
    batch_sentences = jax.random.randint(k_sent, (B, T), 0, V, dtype=jnp.int32)

    scores, paths = bilstm_crf_forward(batch_sentences, params, tag2id)
    jax.block_until_ready((scores, paths))
    print("KERNEL_OK")
</pallas_src>

<mosaic_0001>
module attributes {stable_mosaic.version = 11 : i64} {
  func.func @bilstm_features_kernel(%arg0: i32, %arg1: memref<16x32xf32, #tpu.memory_space<vmem>>, %arg2: memref<2x2x16xf32, #tpu.memory_space<vmem>>, %arg3: memref<2x2x16xf32, #tpu.memory_space<vmem>>, %arg4: memref<32x64xf32, #tpu.memory_space<vmem>>, %arg5: memref<16x64xf32, #tpu.memory_space<vmem>>, %arg6: memref<1x64xf32, #tpu.memory_space<vmem>>, %arg7: memref<32x64xf32, #tpu.memory_space<vmem>>, %arg8: memref<16x64xf32, #tpu.memory_space<vmem>>, %arg9: memref<1x64xf32, #tpu.memory_space<vmem>>, %arg10: memref<32x5xf32, #tpu.memory_space<vmem>>, %arg11: memref<1x5xf32, #tpu.memory_space<vmem>>, %arg12: memref<16x5xf32, #tpu.memory_space<vmem>>) attributes {dimension_semantics = [#tpu.dimension_semantics<arbitrary>], iteration_bounds = array<i64: 1>, scalar_prefetch = 0 : i64, scratch_operands = 0 : i64, tpu.core_type = #tpu.core_type<tc>, window_params = [{pipeline_mode = #tpu.pipeline_mode<synchronous>, transform_indices = @transform_0, window_bounds = array<i64: 16, 32>}, {pipeline_mode = #tpu.pipeline_mode<synchronous>, transform_indices = @transform_1, window_bounds = array<i64: 2, 2, 16>}, {pipeline_mode = #tpu.pipeline_mode<synchronous>, transform_indices = @transform_2, window_bounds = array<i64: 2, 2, 16>}, {pipeline_mode = #tpu.pipeline_mode<synchronous>, transform_indices = @transform_3, window_bounds = array<i64: 32, 64>}, {pipeline_mode = #tpu.pipeline_mode<synchronous>, transform_indices = @transform_4, window_bounds = array<i64: 16, 64>}, {pipeline_mode = #tpu.pipeline_mode<synchronous>, transform_indices = @transform_5, window_bounds = array<i64: 1, 64>}, {pipeline_mode = #tpu.pipeline_mode<synchronous>, transform_indices = @transform_6, window_bounds = array<i64: 32, 64>}, {pipeline_mode = #tpu.pipeline_mode<synchronous>, transform_indices = @transform_7, window_bounds = array<i64: 16, 64>}, {pipeline_mode = #tpu.pipeline_mode<synchronous>, transform_indices = @transform_8, window_bounds = array<i64: 1, 64>}, {pipeline_mode = #tpu.pipeline_mode<synchronous>, transform_indices = @transform_9, window_bounds = array<i64: 32, 5>}, {pipeline_mode = #tpu.pipeline_mode<synchronous>, transform_indices = @transform_10, window_bounds = array<i64: 1, 5>}, {pipeline_mode = #tpu.pipeline_mode<synchronous>, transform_indices = @transform_11, window_bounds = array<i64: 16, 5>}]} {
    %c0 = arith.constant 0 : index
    %c0_0 = arith.constant 0 : index
    %0 = vector.load %arg5[%c0, %c0_0] : memref<16x64xf32, #tpu.memory_space<vmem>>, vector<16x64xf32>
    %c0_1 = arith.constant 0 : index
    %c0_2 = arith.constant 0 : index
    %1 = vector.load %arg8[%c0_1, %c0_2] : memref<16x64xf32, #tpu.memory_space<vmem>>, vector<16x64xf32>
    %c0_3 = arith.constant 0 : index
    %c0_4 = arith.constant 0 : index
    %2 = vector.load %arg1[%c0_3, %c0_4] : memref<16x32xf32, #tpu.memory_space<vmem>>, vector<16x32xf32>
    %c0_5 = arith.constant 0 : index
    %c0_6 = arith.constant 0 : index
    %3 = vector.load %arg4[%c0_5, %c0_6] : memref<32x64xf32, #tpu.memory_space<vmem>>, vector<32x64xf32>
    %cst = arith.constant dense<0.000000e+00> : vector<16x64xf32>
    %4 = tpu.matmul %2, %3, %cst {dimension_numbers = #tpu.dot_dimension_numbers<[1], [0], [0], [1], [0, 0, 1, 1], [], []>} : vector<16x32xf32>, vector<32x64xf32>, vector<16x64xf32> -> vector<16x64xf32>
    %c0_7 = arith.constant 0 : index
    %c0_8 = arith.constant 0 : index
    %5 = vector.load %arg6[%c0_7, %c0_8] : memref<1x64xf32, #tpu.memory_space<vmem>>, vector<1x64xf32>
    %6 = vector.broadcast %5 : vector<1x64xf32> to vector<16x64xf32>
    %7 = arith.addf %4, %6 : vector<16x64xf32>
    %c0_9 = arith.constant 0 : index
    %c0_10 = arith.constant 0 : index
    %8 = vector.load %arg7[%c0_9, %c0_10] : memref<32x64xf32, #tpu.memory_space<vmem>>, vector<32x64xf32>
    %cst_11 = arith.constant dense<0.000000e+00> : vector<16x64xf32>
    %9 = tpu.matmul %2, %8, %cst_11 {dimension_numbers = #tpu.dot_dimension_numbers<[1], [0], [0], [1], [0, 0, 1, 1], [], []>} : vector<16x32xf32>, vector<32x64xf32>, vector<16x64xf32> -> vector<16x64xf32>
    %c0_12 = arith.constant 0 : index
    %c0_13 = arith.constant 0 : index
    %10 = vector.load %arg9[%c0_12, %c0_13] : memref<1x64xf32, #tpu.memory_space<vmem>>, vector<1x64xf32>
    %11 = vector.broadcast %10 : vector<1x64xf32> to vector<16x64xf32>
    %12 = arith.addf %9, %11 : vector<16x64xf32>
    %c0_14 = arith.constant 0 : index
    %c0_15 = arith.constant 0 : index
    %c0_16 = arith.constant 0 : index
    %13 = vector.load %arg2[%c0_14, %c0_15, %c0_16] : memref<2x2x16xf32, #tpu.memory_space<vmem>>, vector<1x2x16xf32>
    %14 = vector.shape_cast %13 : vector<1x2x16xf32> to vector<2x16xf32>
    %c0_17 = arith.constant 0 : index
    %c0_18 = arith.constant 0 : index
    %c0_19 = arith.constant 0 : index
    %15 = vector.load %arg3[%c0_17, %c0_18, %c0_19] : memref<2x2x16xf32, #tpu.memory_space<vmem>>, vector<1x2x16xf32>
    %16 = vector.shape_cast %15 : vector<1x2x16xf32> to vector<2x16xf32>
    %c1 = arith.constant 1 : index
    %c0_20 = arith.constant 0 : index
    %c0_21 = arith.constant 0 : index
    %17 = vector.load %arg2[%c1, %c0_20, %c0_21] : memref<2x2x16xf32, #tpu.memory_space<vmem>>, vector<1x2x16xf32>
    %18 = vector.shape_cast %17 : vector<1x2x16xf32> to vector<2x16xf32>
    %c1_22 = arith.constant 1 : index
    %c0_23 = arith.constant 0 : index
    %c0_24 = arith.constant 0 : index
    %19 = vector.load %arg3[%c1_22, %c0_23, %c0_24] : memref<2x2x16xf32, #tpu.memory_space<vmem>>, vector<1x2x16xf32>
    %20 = vector.shape_cast %19 : vector<1x2x16xf32> to vector<2x16xf32>
    %21 = vector.extract_strided_slice %7 {offsets = [0, 0], sizes = [2, 64], strides = [1, 1]} : vector<16x64xf32> to vector<2x64xf32>
    %cst_25 = arith.constant dense<0.000000e+00> : vector<2x64xf32>
    %22 = tpu.matmul %14, %0, %cst_25 {dimension_numbers = #tpu.dot_dimension_numbers<[1], [0], [0], [1], [0, 0, 1, 1], [], []>} : vector<2x16xf32>, vector<16x64xf32>, vector<2x64xf32> -> vector<2x64xf32>
    %23 = arith.addf %21, %22 : vector<2x64xf32>
    %24 = vector.extract_strided_slice %12 {offsets = [14, 0], sizes = [2, 64], strides = [1, 1]} : vector<16x64xf32> to vector<2x64xf32>
    %cst_26 = arith.constant dense<0.000000e+00> : vector<2x64xf32>
    %25 = tpu.matmul %18, %1, %cst_26 {dimension_numbers = #tpu.dot_dimension_numbers<[1], [0], [0], [1], [0, 0, 1, 1], [], []>} : vector<2x16xf32>, vector<16x64xf32>, vector<2x64xf32> -> vector<2x64xf32>
    %26 = arith.addf %24, %25 : vector<2x64xf32>
    %27 = arith.negf %23 : vector<2x64xf32>
    %28 = math.exp %27 : vector<2x64xf32>
    %cst_27 = arith.constant 1.000000e+00 : f32
    %29 = vector.broadcast %cst_27 : f32 to vector<2x64xf32>
    %30 = arith.addf %29, %28 : vector<2x64xf32>
    %31 = arith.divf %29, %30 : vector<2x64xf32>
    %32 = math.tanh %23 : vector<2x64xf32>
    %33 = vector.extract_strided_slice %31 {offsets = [0, 0], sizes = [2, 16], strides = [1, 1]} : vector<2x64xf32> to vector<2x16xf32>
    %34 = vector.extract_strided_slice %31 {offsets = [0, 16], sizes = [2, 16], strides = [1, 1]} : vector<2x64xf32> to vector<2x16xf32>
    %35 = vector.extract_strided_slice %32 {offsets = [0, 32], sizes = [2, 16], strides = [1, 1]} : vector<2x64xf32> to vector<2x16xf32>
    %36 = vector.extract_strided_slice %31 {offsets = [0, 48], sizes = [2, 16], strides = [1, 1]} : vector<2x64xf32> to vector<2x16xf32>
    %37 = arith.mulf %34, %16 : vector<2x16xf32>
    %38 = arith.mulf %33, %35 : vector<2x16xf32>
    %39 = arith.addf %37, %38 : vector<2x16xf32>
    %40 = math.tanh %39 : vector<2x16xf32>
    %41 = arith.mulf %36, %40 : vector<2x16xf32>
    %42 = arith.negf %26 : vector<2x64xf32>
    %43 = math.exp %42 : vector<2x64xf32>
    %cst_28 = arith.constant 1.000000e+00 : f32
    %44 = vector.broadcast %cst_28 : f32 to vector<2x64xf32>
    %45 = arith.addf %44, %43 : vector<2x64xf32>
    %46 = arith.divf %44, %45 : vector<2x64xf32>
    %47 = math.tanh %26 : vector<2x64xf32>
    %48 = vector.extract_strided_slice %46 {offsets = [0, 0], sizes = [2, 16], strides = [1, 1]} : vector<2x64xf32> to vector<2x16xf32>
    %49 = vector.extract_strided_slice %46 {offsets = [0, 16], sizes = [2, 16], strides = [1, 1]} : vector<2x64xf32> to vector<2x16xf32>
    %50 = vector.extract_strided_slice %47 {offsets = [0, 32], sizes = [2, 16], strides = [1, 1]} : vector<2x64xf32> to vector<2x16xf32>
    %51 = vector.extract_strided_slice %46 {offsets = [0, 48], sizes = [2, 16], strides = [1, 1]} : vector<2x64xf32> to vector<2x16xf32>
    %52 = arith.mulf %49, %20 : vector<2x16xf32>
    %53 = arith.mulf %48, %50 : vector<2x16xf32>
    %54 = arith.addf %52, %53 : vector<2x16xf32>
    %55 = math.tanh %54 : vector<2x16xf32>
    %56 = arith.mulf %51, %55 : vector<2x16xf32>
    %57 = vector.extract_strided_slice %7 {offsets = [2, 0], sizes = [2, 64], strides = [1, 1]} : vector<16x64xf32> to vector<2x64xf32>
    %cst_29 = arith.constant dense<0.000000e+00> : vector<2x64xf32>
    %58 = tpu.matmul %41, %0, %cst_29 {dimension_numbers = #tpu.dot_dimension_numbers<[1], [0], [0], [1], [0, 0, 1, 1], [], []>} : vector<2x16xf32>, vector<16x64xf32>, vector<2x64xf32> -> vector<2x64xf32>
    %59 = arith.addf %57, %58 : vector<2x64xf32>
    %60 = vector.extract_strided_slice %12 {offsets = [12, 0], sizes = [2, 64], strides = [1, 1]} : vector<16x64xf32> to vector<2x64xf32>
    %cst_30 = arith.constant dense<0.000000e+00> : vector<2x64xf32>
    %61 = tpu.matmul %56, %1, %cst_30 {dimension_numbers = #tpu.dot_dimension_numbers<[1], [0], [0], [1], [0, 0, 1, 1], [], []>} : vector<2x16xf32>, vector<16x64xf32>, vector<2x64xf32> -> vector<2x64xf32>
    %62 = arith.addf %60, %61 : vector<2x64xf32>
    %63 = arith.negf %59 : vector<2x64xf32>
    %64 = math.exp %63 : vector<2x64xf32>
    %cst_31 = arith.constant 1.000000e+00 : f32
    %65 = vector.broadcast %cst_31 : f32 to vector<2x64xf32>
    %66 = arith.addf %65, %64 : vector<2x64xf32>
    %67 = arith.divf %65, %66 : vector<2x64xf32>
    %68 = math.tanh %59 : vector<2x64xf32>
    %69 = vector.extract_strided_slice %67 {offsets = [0, 0], sizes = [2, 16], strides = [1, 1]} : vector<2x64xf32> to vector<2x16xf32>
    %70 = vector.extract_strided_slice %67 {offsets = [0, 16], sizes = [2, 16], strides = [1, 1]} : vector<2x64xf32> to vector<2x16xf32>
    %71 = vector.extract_strided_slice %68 {offsets = [0, 32], sizes = [2, 16], strides = [1, 1]} : vector<2x64xf32> to vector<2x16xf32>
    %72 = vector.extract_strided_slice %67 {offsets = [0, 48], sizes = [2, 16], strides = [1, 1]} : vector<2x64xf32> to vector<2x16xf32>
    %73 = arith.mulf %70, %39 : vector<2x16xf32>
    %74 = arith.mulf %69, %71 : vector<2x16xf32>
    %75 = arith.addf %73, %74 : vector<2x16xf32>
    %76 = math.tanh %75 : vector<2x16xf32>
    %77 = arith.mulf %72, %76 : vector<2x16xf32>
    %78 = arith.negf %62 : vector<2x64xf32>
    %79 = math.exp %78 : vector<2x64xf32>
    %cst_32 = arith.constant 1.000000e+00 : f32
    %80 = vector.broadcast %cst_32 : f32 to vector<2x64xf32>
    %81 = arith.addf %80, %79 : vector<2x64xf32>
    %82 = arith.divf %80, %81 : vector<2x64xf32>
    %83 = math.tanh %62 : vector<2x64xf32>
    %84 = vector.extract_strided_slice %82 {offsets = [0, 0], sizes = [2, 16], strides = [1, 1]} : vector<2x64xf32> to vector<2x16xf32>
    %85 = vector.extract_strided_slice %82 {offsets = [0, 16], sizes = [2, 16], strides = [1, 1]} : vector<2x64xf32> to vector<2x16xf32>
    %86 = vector.extract_strided_slice %83 {offsets = [0, 32], sizes = [2, 16], strides = [1, 1]} : vector<2x64xf32> to vector<2x16xf32>
    %87 = vector.extract_strided_slice %82 {offsets = [0, 48], sizes = [2, 16], strides = [1, 1]} : vector<2x64xf32> to vector<2x16xf32>
    %88 = arith.mulf %85, %54 : vector<2x16xf32>
    %89 = arith.mulf %84, %86 : vector<2x16xf32>
    %90 = arith.addf %88, %89 : vector<2x16xf32>
    %91 = math.tanh %90 : vector<2x16xf32>
    %92 = arith.mulf %87, %91 : vector<2x16xf32>
    %93 = vector.extract_strided_slice %7 {offsets = [4, 0], sizes = [2, 64], strides = [1, 1]} : vector<16x64xf32> to vector<2x64xf32>
    %cst_33 = arith.constant dense<0.000000e+00> : vector<2x64xf32>
    %94 = tpu.matmul %77, %0, %cst_33 {dimension_numbers = #tpu.dot_dimension_numbers<[1], [0], [0], [1], [0, 0, 1, 1], [], []>} : vector<2x16xf32>, vector<16x64xf32>, vector<2x64xf32> -> vector<2x64xf32>
    %95 = arith.addf %93, %94 : vector<2x64xf32>
    %96 = vector.extract_strided_slice %12 {offsets = [10, 0], sizes = [2, 64], strides = [1, 1]} : vector<16x64xf32> to vector<2x64xf32>
    %cst_34 = arith.constant dense<0.000000e+00> : vector<2x64xf32>
    %97 = tpu.matmul %92, %1, %cst_34 {dimension_numbers = #tpu.dot_dimension_numbers<[1], [0], [0], [1], [0, 0, 1, 1], [], []>} : vector<2x16xf32>, vector<16x64xf32>, vector<2x64xf32> -> vector<2x64xf32>
    %98 = arith.addf %96, %97 : vector<2x64xf32>
    %99 = arith.negf %95 : vector<2x64xf32>
    %100 = math.exp %99 : vector<2x64xf32>
    %cst_35 = arith.constant 1.000000e+00 : f32
    %101 = vector.broadcast %cst_35 : f32 to vector<2x64xf32>
    %102 = arith.addf %101, %100 : vector<2x64xf32>
    %103 = arith.divf %101, %102 : vector<2x64xf32>
    %104 = math.tanh %95 : vector<2x64xf32>
    %105 = vector.extract_strided_slice %103 {offsets = [0, 0], sizes = [2, 16], strides = [1, 1]} : vector<2x64xf32> to vector<2x16xf32>
    %106 = vector.extract_strided_slice %103 {offsets = [0, 16], sizes = [2, 16], strides = [1, 1]} : vector<2x64xf32> to vector<2x16xf32>
    %107 = vector.extract_strided_slice %104 {offsets = [0, 32], sizes = [2, 16], strides = [1, 1]} : vector<2x64xf32> to vector<2x16xf32>
    %108 = vector.extract_strided_slice %103 {offsets = [0, 48], sizes = [2, 16], strides = [1, 1]} : vector<2x64xf32> to vector<2x16xf32>
    %109 = arith.mulf %106, %75 : vector<2x16xf32>
    %110 = arith.mulf %105, %107 : vector<2x16xf32>
    %111 = arith.addf %109, %110 : vector<2x16xf32>
    %112 = math.tanh %111 : vector<2x16xf32>
    %113 = arith.mulf %108, %112 : vector<2x16xf32>
    %114 = arith.negf %98 : vector<2x64xf32>
    %115 = math.exp %114 : vector<2x64xf32>
    %cst_36 = arith.constant 1.000000e+00 : f32
    %116 = vector.broadcast %cst_36 : f32 to vector<2x64xf32>
    %117 = arith.addf %116, %115 : vector<2x64xf32>
    %118 = arith.divf %116, %117 : vector<2x64xf32>
    %119 = math.tanh %98 : vector<2x64xf32>
    %120 = vector.extract_strided_slice %118 {offsets = [0, 0], sizes = [2, 16], strides = [1, 1]} : vector<2x64xf32> to vector<2x16xf32>
    %121 = vector.extract_strided_slice %118 {offsets = [0, 16], sizes = [2, 16], strides = [1, 1]} : vector<2x64xf32> to vector<2x16xf32>
    %122 = vector.extract_strided_slice %119 {offsets = [0, 32], sizes = [2, 16], strides = [1, 1]} : vector<2x64xf32> to vector<2x16xf32>
    %123 = vector.extract_strided_slice %118 {offsets = [0, 48], sizes = [2, 16], strides = [1, 1]} : vector<2x64xf32> to vector<2x16xf32>
    %124 = arith.mulf %121, %90 : vector<2x16xf32>
    %125 = arith.mulf %120, %122 : vector<2x16xf32>
    %126 = arith.addf %124, %125 : vector<2x16xf32>
    %127 = math.tanh %126 : vector<2x16xf32>
    %128 = arith.mulf %123, %127 : vector<2x16xf32>
    %129 = vector.extract_strided_slice %7 {offsets = [6, 0], sizes = [2, 64], strides = [1, 1]} : vector<16x64xf32> to vector<2x64xf32>
    %cst_37 = arith.constant dense<0.000000e+00> : vector<2x64xf32>
    %130 = tpu.matmul %113, %0, %cst_37 {dimension_numbers = #tpu.dot_dimension_numbers<[1], [0], [0], [1], [0, 0, 1, 1], [], []>} : vector<2x16xf32>, vector<16x64xf32>, vector<2x64xf32> -> vector<2x64xf32>
    %131 = arith.addf %129, %130 : vector<2x64xf32>
    %132 = vector.extract_strided_slice %12 {offsets = [8, 0], sizes = [2, 64], strides = [1, 1]} : vector<16x64xf32> to vector<2x64xf32>
    %cst_38 = arith.constant dense<0.000000e+00> : vector<2x64xf32>
    %133 = tpu.matmul %128, %1, %cst_38 {dimension_numbers = #tpu.dot_dimension_numbers<[1], [0], [0], [1], [0, 0, 1, 1], [], []>} : vector<2x16xf32>, vector<16x64xf32>, vector<2x64xf32> -> vector<2x64xf32>
    %134 = arith.addf %132, %133 : vector<2x64xf32>
    %135 = arith.negf %131 : vector<2x64xf32>
    %136 = math.exp %135 : vector<2x64xf32>
    %cst_39 = arith.constant 1.000000e+00 : f32
    %137 = vector.broadcast %cst_39 : f32 to vector<2x64xf32>
    %138 = arith.addf %137, %136 : vector<2x64xf32>
    %139 = arith.divf %137, %138 : vector<2x64xf32>
    %140 = math.tanh %131 : vector<2x64xf32>
    %141 = vector.extract_strided_slice %139 {offsets = [0, 0], sizes = [2, 16], strides = [1, 1]} : vector<2x64xf32> to vector<2x16xf32>
    %142 = vector.extract_strided_slice %139 {offsets = [0, 16], sizes = [2, 16], strides = [1, 1]} : vector<2x64xf32> to vector<2x16xf32>
    %143 = vector.extract_strided_slice %140 {offsets = [0, 32], sizes = [2, 16], strides = [1, 1]} : vector<2x64xf32> to vector<2x16xf32>
    %144 = vector.extract_strided_slice %139 {offsets = [0, 48], sizes = [2, 16], strides = [1, 1]} : vector<2x64xf32> to vector<2x16xf32>
    %145 = arith.mulf %142, %111 : vector<2x16xf32>
    %146 = arith.mulf %141, %143 : vector<2x16xf32>
    %147 = arith.addf %145, %146 : vector<2x16xf32>
    %148 = math.tanh %147 : vector<2x16xf32>
    %149 = arith.mulf %144, %148 : vector<2x16xf32>
    %150 = arith.negf %134 : vector<2x64xf32>
    %151 = math.exp %150 : vector<2x64xf32>
    %cst_40 = arith.constant 1.000000e+00 : f32
    %152 = vector.broadcast %cst_40 : f32 to vector<2x64xf32>
    %153 = arith.addf %152, %151 : vector<2x64xf32>
    %154 = arith.divf %152, %153 : vector<2x64xf32>
    %155 = math.tanh %134 : vector<2x64xf32>
    %156 = vector.extract_strided_slice %154 {offsets = [0, 0], sizes = [2, 16], strides = [1, 1]} : vector<2x64xf32> to vector<2x16xf32>
    %157 = vector.extract_strided_slice %154 {offsets = [0, 16], sizes = [2, 16], strides = [1, 1]} : vector<2x64xf32> to vector<2x16xf32>
    %158 = vector.extract_strided_slice %155 {offsets = [0, 32], sizes = [2, 16], strides = [1, 1]} : vector<2x64xf32> to vector<2x16xf32>
    %159 = vector.extract_strided_slice %154 {offsets = [0, 48], sizes = [2, 16], strides = [1, 1]} : vector<2x64xf32> to vector<2x16xf32>
    %160 = arith.mulf %157, %126 : vector<2x16xf32>
    %161 = arith.mulf %156, %158 : vector<2x16xf32>
    %162 = arith.addf %160, %161 : vector<2x16xf32>
    %163 = math.tanh %162 : vector<2x16xf32>
    %164 = arith.mulf %159, %163 : vector<2x16xf32>
    %165 = vector.extract_strided_slice %7 {offsets = [8, 0], sizes = [2, 64], strides = [1, 1]} : vector<16x64xf32> to vector<2x64xf32>
    %cst_41 = arith.constant dense<0.000000e+00> : vector<2x64xf32>
    %166 = tpu.matmul %149, %0, %cst_41 {dimension_numbers = #tpu.dot_dimension_numbers<[1], [0], [0], [1], [0, 0, 1, 1], [], []>} : vector<2x16xf32>, vector<16x64xf32>, vector<2x64xf32> -> vector<2x64xf32>
    %167 = arith.addf %165, %166 : vector<2x64xf32>
    %168 = vector.extract_strided_slice %12 {offsets = [6, 0], sizes = [2, 64], strides = [1, 1]} : vector<16x64xf32> to vector<2x64xf32>
    %cst_42 = arith.constant dense<0.000000e+00> : vector<2x64xf32>
    %169 = tpu.matmul %164, %1, %cst_42 {dimension_numbers = #tpu.dot_dimension_numbers<[1], [0], [0], [1], [0, 0, 1, 1], [], []>} : vector<2x16xf32>, vector<16x64xf32>, vector<2x64xf32> -> vector<2x64xf32>
    %170 = arith.addf %168, %169 : vector<2x64xf32>
    %171 = arith.negf %167 : vector<2x64xf32>
    %172 = math.exp %171 : vector<2x64xf32>
    %cst_43 = arith.constant 1.000000e+00 : f32
    %173 = vector.broadcast %cst_43 : f32 to vector<2x64xf32>
    %174 = arith.addf %173, %172 : vector<2x64xf32>
    %175 = arith.divf %173, %174 : vector<2x64xf32>
    %176 = math.tanh %167 : vector<2x64xf32>
    %177 = vector.extract_strided_slice %175 {offsets = [0, 0], sizes = [2, 16], strides = [1, 1]} : vector<2x64xf32> to vector<2x16xf32>
    %178 = vector.extract_strided_slice %175 {offsets = [0, 16], sizes = [2, 16], strides = [1, 1]} : vector<2x64xf32> to vector<2x16xf32>
    %179 = vector.extract_strided_slice %176 {offsets = [0, 32], sizes = [2, 16], strides = [1, 1]} : vector<2x64xf32> to vector<2x16xf32>
    %180 = vector.extract_strided_slice %175 {offsets = [0, 48], sizes = [2, 16], strides = [1, 1]} : vector<2x64xf32> to vector<2x16xf32>
    %181 = arith.mulf %178, %147 : vector<2x16xf32>
    %182 = arith.mulf %177, %179 : vector<2x16xf32>
    %183 = arith.addf %181, %182 : vector<2x16xf32>
    %184 = math.tanh %183 : vector<2x16xf32>
    %185 = arith.mulf %180, %184 : vector<2x16xf32>
    %186 = arith.negf %170 : vector<2x64xf32>
    %187 = math.exp %186 : vector<2x64xf32>
    %cst_44 = arith.constant 1.000000e+00 : f32
    %188 = vector.broadcast %cst_44 : f32 to vector<2x64xf32>
    %189 = arith.addf %188, %187 : vector<2x64xf32>
    %190 = arith.divf %188, %189 : vector<2x64xf32>
    %191 = math.tanh %170 : vector<2x64xf32>
    %192 = vector.extract_strided_slice %190 {offsets = [0, 0], sizes = [2, 16], strides = [1, 1]} : vector<2x64xf32> to vector<2x16xf32>
    %193 = vector.extract_strided_slice %190 {offsets = [0, 16], sizes = [2, 16], strides = [1, 1]} : vector<2x64xf32> to vector<2x16xf32>
    %194 = vector.extract_strided_slice %191 {offsets = [0, 32], sizes = [2, 16], strides = [1, 1]} : vector<2x64xf32> to vector<2x16xf32>
    %195 = vector.extract_strided_slice %190 {offsets = [0, 48], sizes = [2, 16], strides = [1, 1]} : vector<2x64xf32> to vector<2x16xf32>
    %196 = arith.mulf %193, %162 : vector<2x16xf32>
    %197 = arith.mulf %192, %194 : vector<2x16xf32>
    %198 = arith.addf %196, %197 : vector<2x16xf32>
    %199 = math.tanh %198 : vector<2x16xf32>
    %200 = arith.mulf %195, %199 : vector<2x16xf32>
    %201 = vector.extract_strided_slice %7 {offsets = [10, 0], sizes = [2, 64], strides = [1, 1]} : vector<16x64xf32> to vector<2x64xf32>
    %cst_45 = arith.constant dense<0.000000e+00> : vector<2x64xf32>
    %202 = tpu.matmul %185, %0, %cst_45 {dimension_numbers = #tpu.dot_dimension_numbers<[1], [0], [0], [1], [0, 0, 1, 1], [], []>} : vector<2x16xf32>, vector<16x64xf32>, vector<2x64xf32> -> vector<2x64xf32>
    %203 = arith.addf %201, %202 : vector<2x64xf32>
    %204 = vector.extract_strided_slice %12 {offsets = [4, 0], sizes = [2, 64], strides = [1, 1]} : vector<16x64xf32> to vector<2x64xf32>
    %cst_46 = arith.constant dense<0.000000e+00> : vector<2x64xf32>
    %205 = tpu.matmul %200, %1, %cst_46 {dimension_numbers = #tpu.dot_dimension_numbers<[1], [0], [0], [1], [0, 0, 1, 1], [], []>} : vector<2x16xf32>, vector<16x64xf32>, vector<2x64xf32> -> vector<2x64xf32>
    %206 = arith.addf %204, %205 : vector<2x64xf32>
    %207 = arith.negf %203 : vector<2x64xf32>
    %208 = math.exp %207 : vector<2x64xf32>
    %cst_47 = arith.constant 1.000000e+00 : f32
    %209 = vector.broadcast %cst_47 : f32 to vector<2x64xf32>
    %210 = arith.addf %209, %208 : vector<2x64xf32>
    %211 = arith.divf %209, %210 : vector<2x64xf32>
    %212 = math.tanh %203 : vector<2x64xf32>
    %213 = vector.extract_strided_slice %211 {offsets = [0, 0], sizes = [2, 16], strides = [1, 1]} : vector<2x64xf32> to vector<2x16xf32>
    %214 = vector.extract_strided_slice %211 {offsets = [0, 16], sizes = [2, 16], strides = [1, 1]} : vector<2x64xf32> to vector<2x16xf32>
    %215 = vector.extract_strided_slice %212 {offsets = [0, 32], sizes = [2, 16], strides = [1, 1]} : vector<2x64xf32> to vector<2x16xf32>
    %216 = vector.extract_strided_slice %211 {offsets = [0, 48], sizes = [2, 16], strides = [1, 1]} : vector<2x64xf32> to vector<2x16xf32>
    %217 = arith.mulf %214, %183 : vector<2x16xf32>
    %218 = arith.mulf %213, %215 : vector<2x16xf32>
    %219 = arith.addf %217, %218 : vector<2x16xf32>
    %220 = math.tanh %219 : vector<2x16xf32>
    %221 = arith.mulf %216, %220 : vector<2x16xf32>
    %222 = arith.negf %206 : vector<2x64xf32>
    %223 = math.exp %222 : vector<2x64xf32>
    %cst_48 = arith.constant 1.000000e+00 : f32
    %224 = vector.broadcast %cst_48 : f32 to vector<2x64xf32>
    %225 = arith.addf %224, %223 : vector<2x64xf32>
    %226 = arith.divf %224, %225 : vector<2x64xf32>
    %227 = math.tanh %206 : vector<2x64xf32>
    %228 = vector.extract_strided_slice %226 {offsets = [0, 0], sizes = [2, 16], strides = [1, 1]} : vector<2x64xf32> to vector<2x16xf32>
    %229 = vector.extract_strided_slice %226 {offsets = [0, 16], sizes = [2, 16], strides = [1, 1]} : vector<2x64xf32> to vector<2x16xf32>
    %230 = vector.extract_strided_slice %227 {offsets = [0, 32], sizes = [2, 16], strides = [1, 1]} : vector<2x64xf32> to vector<2x16xf32>
    %231 = vector.extract_strided_slice %226 {offsets = [0, 48], sizes = [2, 16], strides = [1, 1]} : vector<2x64xf32> to vector<2x16xf32>
    %232 = arith.mulf %229, %198 : vector<2x16xf32>
    %233 = arith.mulf %228, %230 : vector<2x16xf32>
    %234 = arith.addf %232, %233 : vector<2x16xf32>
    %235 = math.tanh %234 : vector<2x16xf32>
    %236 = arith.mulf %231, %235 : vector<2x16xf32>
    %237 = vector.extract_strided_slice %7 {offsets = [12, 0], sizes = [2, 64], strides = [1, 1]} : vector<16x64xf32> to vector<2x64xf32>
    %cst_49 = arith.constant dense<0.000000e+00> : vector<2x64xf32>
    %238 = tpu.matmul %221, %0, %cst_49 {dimension_numbers = #tpu.dot_dimension_numbers<[1], [0], [0], [1], [0, 0, 1, 1], [], []>} : vector<2x16xf32>, vector<16x64xf32>, vector<2x64xf32> -> vector<2x64xf32>
    %239 = arith.addf %237, %238 : vector<2x64xf32>
    %240 = vector.extract_strided_slice %12 {offsets = [2, 0], sizes = [2, 64], strides = [1, 1]} : vector<16x64xf32> to vector<2x64xf32>
    %cst_50 = arith.constant dense<0.000000e+00> : vector<2x64xf32>
    %241 = tpu.matmul %236, %1, %cst_50 {dimension_numbers = #tpu.dot_dimension_numbers<[1], [0], [0], [1], [0, 0, 1, 1], [], []>} : vector<2x16xf32>, vector<16x64xf32>, vector<2x64xf32> -> vector<2x64xf32>
    %242 = arith.addf %240, %241 : vector<2x64xf32>
    %243 = arith.negf %239 : vector<2x64xf32>
    %244 = math.exp %243 : vector<2x64xf32>
    %cst_51 = arith.constant 1.000000e+00 : f32
    %245 = vector.broadcast %cst_51 : f32 to vector<2x64xf32>
    %246 = arith.addf %245, %244 : vector<2x64xf32>
    %247 = arith.divf %245, %246 : vector<2x64xf32>
    %248 = math.tanh %239 : vector<2x64xf32>
    %249 = vector.extract_strided_slice %247 {offsets = [0, 0], sizes = [2, 16], strides = [1, 1]} : vector<2x64xf32> to vector<2x16xf32>
    %250 = vector.extract_strided_slice %247 {offsets = [0, 16], sizes = [2, 16], strides = [1, 1]} : vector<2x64xf32> to vector<2x16xf32>
    %251 = vector.extract_strided_slice %248 {offsets = [0, 32], sizes = [2, 16], strides = [1, 1]} : vector<2x64xf32> to vector<2x16xf32>
    %252 = vector.extract_strided_slice %247 {offsets = [0, 48], sizes = [2, 16], strides = [1, 1]} : vector<2x64xf32> to vector<2x16xf32>
    %253 = arith.mulf %250, %219 : vector<2x16xf32>
    %254 = arith.mulf %249, %251 : vector<2x16xf32>
    %255 = arith.addf %253, %254 : vector<2x16xf32>
    %256 = math.tanh %255 : vector<2x16xf32>
    %257 = arith.mulf %252, %256 : vector<2x16xf32>
    %258 = arith.negf %242 : vector<2x64xf32>
    %259 = math.exp %258 : vector<2x64xf32>
    %cst_52 = arith.constant 1.000000e+00 : f32
    %260 = vector.broadcast %cst_52 : f32 to vector<2x64xf32>
    %261 = arith.addf %260, %259 : vector<2x64xf32>
    %262 = arith.divf %260, %261 : vector<2x64xf32>
    %263 = math.tanh %242 : vector<2x64xf32>
    %264 = vector.extract_strided_slice %262 {offsets = [0, 0], sizes = [2, 16], strides = [1, 1]} : vector<2x64xf32> to vector<2x16xf32>
    %265 = vector.extract_strided_slice %262 {offsets = [0, 16], sizes = [2, 16], strides = [1, 1]} : vector<2x64xf32> to vector<2x16xf32>
    %266 = vector.extract_strided_slice %263 {offsets = [0, 32], sizes = [2, 16], strides = [1, 1]} : vector<2x64xf32> to vector<2x16xf32>
    %267 = vector.extract_strided_slice %262 {offsets = [0, 48], sizes = [2, 16], strides = [1, 1]} : vector<2x64xf32> to vector<2x16xf32>
    %268 = arith.mulf %265, %234 : vector<2x16xf32>
    %269 = arith.mulf %264, %266 : vector<2x16xf32>
    %270 = arith.addf %268, %269 : vector<2x16xf32>
    %271 = math.tanh %270 : vector<2x16xf32>
    %272 = arith.mulf %267, %271 : vector<2x16xf32>
    %273 = vector.extract_strided_slice %7 {offsets = [14, 0], sizes = [2, 64], strides = [1, 1]} : vector<16x64xf32> to vector<2x64xf32>
    %cst_53 = arith.constant dense<0.000000e+00> : vector<2x64xf32>
    %274 = tpu.matmul %257, %0, %cst_53 {dimension_numbers = #tpu.dot_dimension_numbers<[1], [0], [0], [1], [0, 0, 1, 1], [], []>} : vector<2x16xf32>, vector<16x64xf32>, vector<2x64xf32> -> vector<2x64xf32>
    %275 = arith.addf %273, %274 : vector<2x64xf32>
    %276 = vector.extract_strided_slice %12 {offsets = [0, 0], sizes = [2, 64], strides = [1, 1]} : vector<16x64xf32> to vector<2x64xf32>
    %cst_54 = arith.constant dense<0.000000e+00> : vector<2x64xf32>
    %277 = tpu.matmul %272, %1, %cst_54 {dimension_numbers = #tpu.dot_dimension_numbers<[1], [0], [0], [1], [0, 0, 1, 1], [], []>} : vector<2x16xf32>, vector<16x64xf32>, vector<2x64xf32> -> vector<2x64xf32>
    %278 = arith.addf %276, %277 : vector<2x64xf32>
    %279 = arith.negf %275 : vector<2x64xf32>
    %280 = math.exp %279 : vector<2x64xf32>
    %cst_55 = arith.constant 1.000000e+00 : f32
    %281 = vector.broadcast %cst_55 : f32 to vector<2x64xf32>
    %282 = arith.addf %281, %280 : vector<2x64xf32>
    %283 = arith.divf %281, %282 : vector<2x64xf32>
    %284 = math.tanh %275 : vector<2x64xf32>
    %285 = vector.extract_strided_slice %283 {offsets = [0, 0], sizes = [2, 16], strides = [1, 1]} : vector<2x64xf32> to vector<2x16xf32>
    %286 = vector.extract_strided_slice %283 {offsets = [0, 16], sizes = [2, 16], strides = [1, 1]} : vector<2x64xf32> to vector<2x16xf32>
    %287 = vector.extract_strided_slice %284 {offsets = [0, 32], sizes = [2, 16], strides = [1, 1]} : vector<2x64xf32> to vector<2x16xf32>
    %288 = vector.extract_strided_slice %283 {offsets = [0, 48], sizes = [2, 16], strides = [1, 1]} : vector<2x64xf32> to vector<2x16xf32>
    %289 = arith.mulf %286, %255 : vector<2x16xf32>
    %290 = arith.mulf %285, %287 : vector<2x16xf32>
    %291 = arith.addf %289, %290 : vector<2x16xf32>
    %292 = math.tanh %291 : vector<2x16xf32>
    %293 = arith.mulf %288, %292 : vector<2x16xf32>
    %294 = arith.negf %278 : vector<2x64xf32>
    %295 = math.exp %294 : vector<2x64xf32>
    %cst_56 = arith.constant 1.000000e+00 : f32
    %296 = vector.broadcast %cst_56 : f32 to vector<2x64xf32>
    %297 = arith.addf %296, %295 : vector<2x64xf32>
    %298 = arith.divf %296, %297 : vector<2x64xf32>
    %299 = math.tanh %278 : vector<2x64xf32>
    %300 = vector.extract_strided_slice %298 {offsets = [0, 0], sizes = [2, 16], strides = [1, 1]} : vector<2x64xf32> to vector<2x16xf32>
    %301 = vector.extract_strided_slice %298 {offsets = [0, 16], sizes = [2, 16], strides = [1, 1]} : vector<2x64xf32> to vector<2x16xf32>
    %302 = vector.extract_strided_slice %299 {offsets = [0, 32], sizes = [2, 16], strides = [1, 1]} : vector<2x64xf32> to vector<2x16xf32>
    %303 = vector.extract_strided_slice %298 {offsets = [0, 48], sizes = [2, 16], strides = [1, 1]} : vector<2x64xf32> to vector<2x16xf32>
    %304 = arith.mulf %301, %270 : vector<2x16xf32>
    %305 = arith.mulf %300, %302 : vector<2x16xf32>
    %306 = arith.addf %304, %305 : vector<2x16xf32>
    %307 = math.tanh %306 : vector<2x16xf32>
    %308 = arith.mulf %303, %307 : vector<2x16xf32>
    %309 = vector.extract_strided_slice %41 {offsets = [0, 0], sizes = [1, 16], strides = [1, 1]} : vector<2x16xf32> to vector<1x16xf32>
    %310 = vector.extract_strided_slice %77 {offsets = [0, 0], sizes = [1, 16], strides = [1, 1]} : vector<2x16xf32> to vector<1x16xf32>
    %311 = vector.extract_strided_slice %113 {offsets = [0, 0], sizes = [1, 16], strides = [1, 1]} : vector<2x16xf32> to vector<1x16xf32>
    %312 = vector.extract_strided_slice %149 {offsets = [0, 0], sizes = [1, 16], strides = [1, 1]} : vector<2x16xf32> to vector<1x16xf32>
    %313 = vector.extract_strided_slice %185 {offsets = [0, 0], sizes = [1, 16], strides = [1, 1]} : vector<2x16xf32> to vector<1x16xf32>
    %314 = vector.extract_strided_slice %221 {offsets = [0, 0], sizes = [1, 16], strides = [1, 1]} : vector<2x16xf32> to vector<1x16xf32>
    %315 = vector.extract_strided_slice %257 {offsets = [0, 0], sizes = [1, 16], strides = [1, 1]} : vector<2x16xf32> to vector<1x16xf32>
    %316 = vector.extract_strided_slice %293 {offsets = [0, 0], sizes = [1, 16], strides = [1, 1]} : vector<2x16xf32> to vector<1x16xf32>
    %317 = vector.extract_strided_slice %41 {offsets = [1, 0], sizes = [1, 16], strides = [1, 1]} : vector<2x16xf32> to vector<1x16xf32>
    %318 = vector.extract_strided_slice %77 {offsets = [1, 0], sizes = [1, 16], strides = [1, 1]} : vector<2x16xf32> to vector<1x16xf32>
    %319 = vector.extract_strided_slice %113 {offsets = [1, 0], sizes = [1, 16], strides = [1, 1]} : vector<2x16xf32> to vector<1x16xf32>
    %320 = vector.extract_strided_slice %149 {offsets = [1, 0], sizes = [1, 16], strides = [1, 1]} : vector<2x16xf32> to vector<1x16xf32>
    %321 = vector.extract_strided_slice %185 {offsets = [1, 0], sizes = [1, 16], strides = [1, 1]} : vector<2x16xf32> to vector<1x16xf32>
    %322 = vector.extract_strided_slice %221 {offsets = [1, 0], sizes = [1, 16], strides = [1, 1]} : vector<2x16xf32> to vector<1x16xf32>
    %323 = vector.extract_strided_slice %257 {offsets = [1, 0], sizes = [1, 16], strides = [1, 1]} : vector<2x16xf32> to vector<1x16xf32>
    %324 = vector.extract_strided_slice %293 {offsets = [1, 0], sizes = [1, 16], strides = [1, 1]} : vector<2x16xf32> to vector<1x16xf32>
    %325 = tpu.concatenate %309, %310, %311, %312, %313, %314, %315, %316, %317, %318, %319, %320, %321, %322, %323, %324 in 0 : vector<1x16xf32>, vector<1x16xf32>, vector<1x16xf32>, vector<1x16xf32>, vector<1x16xf32>, vector<1x16xf32>, vector<1x16xf32>, vector<1x16xf32>, vector<1x16xf32>, vector<1x16xf32>, vector<1x16xf32>, vector<1x16xf32>, vector<1x16xf32>, vector<1x16xf32>, vector<1x16xf32>, vector<1x16xf32> -> vector<16x16xf32>
    %326 = vector.extract_strided_slice %308 {offsets = [0, 0], sizes = [1, 16], strides = [1, 1]} : vector<2x16xf32> to vector<1x16xf32>
    %327 = vector.extract_strided_slice %272 {offsets = [0, 0], sizes = [1, 16], strides = [1, 1]} : vector<2x16xf32> to vector<1x16xf32>
    %328 = vector.extract_strided_slice %236 {offsets = [0, 0], sizes = [1, 16], strides = [1, 1]} : vector<2x16xf32> to vector<1x16xf32>
    %329 = vector.extract_strided_slice %200 {offsets = [0, 0], sizes = [1, 16], strides = [1, 1]} : vector<2x16xf32> to vector<1x16xf32>
    %330 = vector.extract_strided_slice %164 {offsets = [0, 0], sizes = [1, 16], strides = [1, 1]} : vector<2x16xf32> to vector<1x16xf32>
    %331 = vector.extract_strided_slice %128 {offsets = [0, 0], sizes = [1, 16], strides = [1, 1]} : vector<2x16xf32> to vector<1x16xf32>
    %332 = vector.extract_strided_slice %92 {offsets = [0, 0], sizes = [1, 16], strides = [1, 1]} : vector<2x16xf32> to vector<1x16xf32>
    %333 = vector.extract_strided_slice %56 {offsets = [0, 0], sizes = [1, 16], strides = [1, 1]} : vector<2x16xf32> to vector<1x16xf32>
    %334 = vector.extract_strided_slice %308 {offsets = [1, 0], sizes = [1, 16], strides = [1, 1]} : vector<2x16xf32> to vector<1x16xf32>
    %335 = vector.extract_strided_slice %272 {offsets = [1, 0], sizes = [1, 16], strides = [1, 1]} : vector<2x16xf32> to vector<1x16xf32>
    %336 = vector.extract_strided_slice %236 {offsets = [1, 0], sizes = [1, 16], strides = [1, 1]} : vector<2x16xf32> to vector<1x16xf32>
    %337 = vector.extract_strided_slice %200 {offsets = [1, 0], sizes = [1, 16], strides = [1, 1]} : vector<2x16xf32> to vector<1x16xf32>
    %338 = vector.extract_strided_slice %164 {offsets = [1, 0], sizes = [1, 16], strides = [1, 1]} : vector<2x16xf32> to vector<1x16xf32>
    %339 = vector.extract_strided_slice %128 {offsets = [1, 0], sizes = [1, 16], strides = [1, 1]} : vector<2x16xf32> to vector<1x16xf32>
    %340 = vector.extract_strided_slice %92 {offsets = [1, 0], sizes = [1, 16], strides = [1, 1]} : vector<2x16xf32> to vector<1x16xf32>
    %341 = vector.extract_strided_slice %56 {offsets = [1, 0], sizes = [1, 16], strides = [1, 1]} : vector<2x16xf32> to vector<1x16xf32>
    %342 = tpu.concatenate %326, %327, %328, %329, %330, %331, %332, %333, %334, %335, %336, %337, %338, %339, %340, %341 in 0 : vector<1x16xf32>, vector<1x16xf32>, vector<1x16xf32>, vector<1x16xf32>, vector<1x16xf32>, vector<1x16xf32>, vector<1x16xf32>, vector<1x16xf32>, vector<1x16xf32>, vector<1x16xf32>, vector<1x16xf32>, vector<1x16xf32>, vector<1x16xf32>, vector<1x16xf32>, vector<1x16xf32>, vector<1x16xf32> -> vector<16x16xf32>
    %c0_57 = arith.constant 0 : index
    %c0_58 = arith.constant 0 : index
    %343 = vector.load %arg10[%c0_57, %c0_58] : memref<32x5xf32, #tpu.memory_space<vmem>>, vector<16x5xf32>
    %cst_59 = arith.constant dense<0.000000e+00> : vector<16x5xf32>
    %344 = tpu.matmul %325, %343, %cst_59 {dimension_numbers = #tpu.dot_dimension_numbers<[1], [0], [0], [1], [0, 0, 1, 1], [], []>} : vector<16x16xf32>, vector<16x5xf32>, vector<16x5xf32> -> vector<16x5xf32>
    %c16 = arith.constant 16 : index
    %c0_60 = arith.constant 0 : index
    %345 = vector.load %arg10[%c16, %c0_60] : memref<32x5xf32, #tpu.memory_space<vmem>>, vector<16x5xf32>
    %cst_61 = arith.constant dense<0.000000e+00> : vector<16x5xf32>
    %346 = tpu.matmul %342, %345, %cst_61 {dimension_numbers = #tpu.dot_dimension_numbers<[1], [0], [0], [1], [0, 0, 1, 1], [], []>} : vector<16x16xf32>, vector<16x5xf32>, vector<16x5xf32> -> vector<16x5xf32>
    %347 = arith.addf %344, %346 : vector<16x5xf32>
    %c0_62 = arith.constant 0 : index
    %c0_63 = arith.constant 0 : index
    %348 = vector.load %arg11[%c0_62, %c0_63] : memref<1x5xf32, #tpu.memory_space<vmem>>, vector<1x5xf32>
    %349 = vector.broadcast %348 : vector<1x5xf32> to vector<16x5xf32>
    %350 = arith.addf %347, %349 : vector<16x5xf32>
    %c0_64 = arith.constant 0 : index
    %c0_65 = arith.constant 0 : index
    %351 = vector.load %arg12[%c0_64, %c0_65] : memref<16x5xf32, #tpu.memory_space<vmem>>, vector<16x5xf32>
    tpu.vector_store %arg12[%c0_64, %c0_65], %350 {strides = array<i32>} : memref<16x5xf32, #tpu.memory_space<vmem>>, vector<16x5xf32>,
    return
  }
  func.func @transform_0(%arg0: i32) -> (i32, i32) {
    %c0_i32 = arith.constant 0 : i32
    %c0_i32_0 = arith.constant 0 : i32
    %c0_i32_1 = arith.constant 0 : i32
    return %c0_i32, %c0_i32_0 : i32, i32
  }
  func.func @transform_1(%arg0: i32) -> (i32, i32, i32) {
    %c0_i32 = arith.constant 0 : i32
    %c0_i32_0 = arith.constant 0 : i32
    %c0_i32_1 = arith.constant 0 : i32
    %c0_i32_2 = arith.constant 0 : i32
    return %c0_i32, %c0_i32_0, %c0_i32_1 : i32, i32, i32
  }
  func.func @transform_2(%arg0: i32) -> (i32, i32, i32) {
    %c0_i32 = arith.constant 0 : i32
    %c0_i32_0 = arith.constant 0 : i32
    %c0_i32_1 = arith.constant 0 : i32
    %c0_i32_2 = arith.constant 0 : i32
    return %c0_i32, %c0_i32_0, %c0_i32_1 : i32, i32, i32
  }
  func.func @transform_3(%arg0: i32) -> (i32, i32) {
    %c0_i32 = arith.constant 0 : i32
    %c0_i32_0 = arith.constant 0 : i32
    %c0_i32_1 = arith.constant 0 : i32
    return %c0_i32, %c0_i32_0 : i32, i32
  }
  func.func @transform_4(%arg0: i32) -> (i32, i32) {
    %c0_i32 = arith.constant 0 : i32
    %c0_i32_0 = arith.constant 0 : i32
    %c0_i32_1 = arith.constant 0 : i32
    return %c0_i32, %c0_i32_0 : i32, i32
  }
  func.func @transform_5(%arg0: i32) -> (i32, i32) {
    %c0_i32 = arith.constant 0 : i32
    %c0_i32_0 = arith.constant 0 : i32
    %c0_i32_1 = arith.constant 0 : i32
    return %c0_i32, %c0_i32_0 : i32, i32
  }
  func.func @transform_6(%arg0: i32) -> (i32, i32) {
    %c0_i32 = arith.constant 0 : i32
    %c0_i32_0 = arith.constant 0 : i32
    %c0_i32_1 = arith.constant 0 : i32
    return %c0_i32, %c0_i32_0 : i32, i32
  }
  func.func @transform_7(%arg0: i32) -> (i32, i32) {
    %c0_i32 = arith.constant 0 : i32
    %c0_i32_0 = arith.constant 0 : i32
    %c0_i32_1 = arith.constant 0 : i32
    return %c0_i32, %c0_i32_0 : i32, i32
  }
  func.func @transform_8(%arg0: i32) -> (i32, i32) {
    %c0_i32 = arith.constant 0 : i32
    %c0_i32_0 = arith.constant 0 : i32
    %c0_i32_1 = arith.constant 0 : i32
    return %c0_i32, %c0_i32_0 : i32, i32
  }
  func.func @transform_9(%arg0: i32) -> (i32, i32) {
    %c0_i32 = arith.constant 0 : i32
    %c0_i32_0 = arith.constant 0 : i32
    %c0_i32_1 = arith.constant 0 : i32
    return %c0_i32, %c0_i32_0 : i32, i32
  }
  func.func @transform_10(%arg0: i32) -> (i32, i32) {
    %c0_i32 = arith.constant 0 : i32
    %c0_i32_0 = arith.constant 0 : i32
    %c0_i32_1 = arith.constant 0 : i32
    return %c0_i32, %c0_i32_0 : i32, i32
  }
  func.func @transform_11(%arg0: i32) -> (i32, i32) {
    %c0_i32 = arith.constant 0 : i32
    %c0_i32_0 = arith.constant 0 : i32
    %c0_i32_1 = arith.constant 0 : i32
    return %c0_i32, %c0_i32_0 : i32, i32
  }
}

</mosaic_0001>

<llo_original>
// kernel: tpu_custom_call.1
$region0: #{tpu_custom_call.1}
  #allocation0 [shape = 'u32[]', space=smem, size = 0x4, offset = 0x4, fixed_abs, tag = 'smem constant byte address 0x4 - core index']
  #allocation1 [shape = 'u32[144,128]{1,0:T(1,128)}', space=vmem, size = 0x12000, scoped, tag = 'internal scratch']
  %s0 = inlined_call_operand.vmem [shape: f32[16,32], index: 0, kind: input, shape index: {}]
  %s1 = inlined_call_operand.hbm [shape: f32[2,2,16], index: 1, kind: input, shape index: {}]
  %s2 = inlined_call_operand.hbm [shape: f32[2,2,16], index: 2, kind: input, shape index: {}]
  %s3 = inlined_call_operand.vmem [shape: f32[32,64], index: 3, kind: input, shape index: {}]
  %s4 = inlined_call_operand.hbm [shape: f32[16,64], index: 4, kind: input, shape index: {}]
  %s5 = inlined_call_operand.vmem [shape: f32[1,64], index: 5, kind: input, shape index: {}]
  %s6 = inlined_call_operand.hbm [shape: f32[32,64], index: 6, kind: input, shape index: {}]
  %s7 = inlined_call_operand.vmem [shape: f32[16,64], index: 7, kind: input, shape index: {}]
  %s8 = inlined_call_operand.vmem [shape: f32[1,64], index: 8, kind: input, shape index: {}]
  %s9 = inlined_call_operand.vmem [shape: f32[32,5], index: 9, kind: input, shape index: {}]
  %s10 = inlined_call_operand.vmem [shape: f32[1,5], index: 10, kind: input, shape index: {}]
  %s11 = inlined_call_operand.vmem [shape: f32[16,5], index: 11, kind: output, shape index: {}]
  %s12 = sld [smem:[#allocation0]]
  $region70: #{tpu_custom_call.1} parent=0
    _
  %s14 = ssub.s32 1, %s12
  %s15 = scalar_select 0, %s14, %s12
  $region1: #{tpu_custom_call.1} parent=0
    #allocation2 [shape = 'u8[2048]{0}', space=vmem, size = 0x800, scoped, tag = 'input window, operand 1, single buffered']
    #allocation3 [shape = 's32[1]{0}', space=sflag, size = 0x4, scoped, tag = 'scoped memory for tpu_custom_call.1']
    #allocation4 [shape = 'u8[2048]{0}', space=vmem, size = 0x800, scoped, tag = 'input window, operand 2, single buffered']
    #allocation5 [shape = 's32[1]{0}', space=sflag, size = 0x4, scoped, tag = 'scoped memory for tpu_custom_call.1']
    #allocation6 [shape = 'u8[8192]{0}', space=vmem, size = 0x2000, scoped, tag = 'input window, operand 4, single buffered']
    #allocation7 [shape = 'u8[16384]{0}', space=vmem, size = 0x4000, scoped, tag = 'input window, operand 6, single buffered']
    #allocation8 [shape = 's32[1]{0}', space=sflag, size = 0x4, scoped, tag = 'scoped memory for tpu_custom_call.1']
    %16 = vsyncpa [#allocation3], 0
    %17 = vsyncpa [#allocation5], 0
    %18 = vsyncpa [#allocation8], 0
    // Predicated region
    $region2: #{tpu_custom_call.1} parent=1 // pred_check
      _
    $region3: #{tpu_custom_call.1} parent=1 // pred_check_branch
      %20 = sbr.rel (0) target = $region5
    $region4: #{tpu_custom_call.1} parent=1 // pred_region
      _
    $region5: #{tpu_custom_call.1} parent=1 // pred_fallthru
      _
    // Predicated region
    $region6: #{tpu_custom_call.1} parent=1 // pred_check
      _
    $region7: #{tpu_custom_call.1} parent=1 // pred_check_branch
      %22 = sbr.rel (0) target = $region9
    $region8: #{tpu_custom_call.1} parent=1 // pred_region
      %s24 = ssub.s32 64, 64
      %25 = vsyncadd [#allocation3], %s24
      %s26 = sshll.u32 [#allocation2], 4
      %s27 = int_to_ptr.vmem [resolvable:$true] %s26
      %32 = dma.hbm_to_vmem [thread:$0]  %s1, 64, %s27, [#allocation3], 32, 32, 2
    $region9: #{tpu_custom_call.1} parent=1 // pred_fallthru
      _
    // Predicated region
    $region10: #{tpu_custom_call.1} parent=1 // pred_check
      _
    $region11: #{tpu_custom_call.1} parent=1 // pred_check_branch
      %34 = sbr.rel (0) target = $region13
    $region12: #{tpu_custom_call.1} parent=1 // pred_region
      %s36 = ssub.s32 64, 64
      %37 = vsyncadd [#allocation5], %s36
      %s38 = sshll.u32 [#allocation4], 4
      %s39 = int_to_ptr.vmem [resolvable:$true] %s38
      %44 = dma.hbm_to_vmem [thread:$0]  %s2, 64, %s39, [#allocation5], 32, 32, 2
    $region13: #{tpu_custom_call.1} parent=1 // pred_fallthru
      _
    // Predicated region
    $region14: #{tpu_custom_call.1} parent=1 // pred_check
      _
    $region15: #{tpu_custom_call.1} parent=1 // pred_check_branch
      %46 = sbr.rel (0) target = $region17
    $region16: #{tpu_custom_call.1} parent=1 // pred_region
      _
    $region17: #{tpu_custom_call.1} parent=1 // pred_fallthru
      _
    // Predicated region
    $region18: #{tpu_custom_call.1} parent=1 // pred_check
      _
    $region19: #{tpu_custom_call.1} parent=1 // pred_check_branch
      %48 = sbr.rel (0) target = $region21
    $region20: #{tpu_custom_call.1} parent=1 // pred_region
      %s50 = ssub.s32 256, 256
      %51 = vsyncadd [#allocation5], %s50
      %s52 = sshll.u32 [#allocation6], 4
      %s53 = int_to_ptr.vmem [resolvable:$true] %s52
      %58 = dma.hbm_to_vmem [thread:$0]  %s4, 256, %s53, [#allocation5], 128, 128, 8
    $region21: #{tpu_custom_call.1} parent=1 // pred_fallthru
      _
    // Predicated region
    $region22: #{tpu_custom_call.1} parent=1 // pred_check
      _
    $region23: #{tpu_custom_call.1} parent=1 // pred_check_branch
      %60 = sbr.rel (0) target = $region25
    $region24: #{tpu_custom_call.1} parent=1 // pred_region
      _
    $region25: #{tpu_custom_call.1} parent=1 // pred_fallthru
      _
    // Predicated region
    $region26: #{tpu_custom_call.1} parent=1 // pred_check
      _
    $region27: #{tpu_custom_call.1} parent=1 // pred_check_branch
      %62 = sbr.rel (0) target = $region29
    $region28: #{tpu_custom_call.1} parent=1 // pred_region
      %s64 = ssub.s32 512, 512
      %65 = vsyncadd [#allocation8], %s64
      %s66 = sshll.u32 [#allocation7], 4
      %s67 = int_to_ptr.vmem [resolvable:$true] %s66
      %72 = dma.hbm_to_vmem [thread:$0]  %s6, 512, %s67, [#allocation8], 128, 128, 8
    $region29: #{tpu_custom_call.1} parent=1 // pred_fallthru
      _
    // Predicated region
    $region30: #{tpu_custom_call.1} parent=1 // pred_check
      _
    $region31: #{tpu_custom_call.1} parent=1 // pred_check_branch
      %74 = sbr.rel (0) target = $region33
    $region32: #{tpu_custom_call.1} parent=1 // pred_region
      _
    $region33: #{tpu_custom_call.1} parent=1 // pred_fallthru
      _
    // Predicated region
    $region34: #{tpu_custom_call.1} parent=1 // pred_check
      _
    $region35: #{tpu_custom_call.1} parent=1 // pred_check_branch
      %76 = sbr.rel (0) target = $region37
    $region36: #{tpu_custom_call.1} parent=1 // pred_region
      _
    $region37: #{tpu_custom_call.1} parent=1 // pred_fallthru
      _
    // Predicated region
    $region38: #{tpu_custom_call.1} parent=1 // pred_check
      _
    $region39: #{tpu_custom_call.1} parent=1 // pred_check_branch
      %78 = sbr.rel (0) target = $region41
    $region40: #{tpu_custom_call.1} parent=1 // pred_region
      _
    $region41: #{tpu_custom_call.1} parent=1 // pred_fallthru
      _
    // Predicated region
    $region42: #{tpu_custom_call.1} parent=1 // pred_check
      _
    $region43: #{tpu_custom_call.1} parent=1 // pred_check_branch
      %80 = sbr.rel (0) target = $region45
    $region44: #{tpu_custom_call.1} parent=1 // pred_region
      _
    $region45: #{tpu_custom_call.1} parent=1 // pred_fallthru
      _
    // Predicated region
    $region46: #{tpu_custom_call.1} parent=1 // pred_check
      _
    $region47: #{tpu_custom_call.1} parent=1 // pred_check_branch
      %82 = sbr.rel (0) target = $region49
    $region48: #{tpu_custom_call.1} parent=1 // pred_region
      %83 = dma.done [#allocation3], 64
    $region49: #{tpu_custom_call.1} parent=1 // pred_fallthru
      _
    // Predicated region
    $region50: #{tpu_custom_call.1} parent=1 // pred_check
      _
    $region51: #{tpu_custom_call.1} parent=1 // pred_check_branch
      %85 = sbr.rel (0) target = $region53
    $region52: #{tpu_custom_call.1} parent=1 // pred_region
      %86 = dma.done [#allocation5], 64
    $region53: #{tpu_custom_call.1} parent=1 // pred_fallthru
      _
    // Predicated region
    $region54: #{tpu_custom_call.1} parent=1 // pred_check
      _
    $region55: #{tpu_custom_call.1} parent=1 // pred_check_branch
      %88 = sbr.rel (0) target = $region57
    $region56: #{tpu_custom_call.1} parent=1 // pred_region
      %89 = dma.done [#allocation5], 256
    $region57: #{tpu_custom_call.1} parent=1 // pred_fallthru
      _
    // Predicated region
    $region58: #{tpu_custom_call.1} parent=1 // pred_check
      _
    $region59: #{tpu_custom_call.1} parent=1 // pred_check_branch
      %91 = sbr.rel (0) target = $region61
    $region60: #{tpu_custom_call.1} parent=1 // pred_region
      %92 = dma.done [#allocation8], 512
    $region61: #{tpu_custom_call.1} parent=1 // pred_fallthru
      _
    %v93 = vld [vmem:[#allocation6] sm:$0xff]
    %v94 = vld [vmem:[#allocation6 + $0x8] sm:$0xff]
    %v95 = vld [vmem:[%s7] sm:$0xff]
    %v96 = vld [vmem:[%s7 + $0x8] sm:$0xff]
    %v97 = vld [vmem:[%s0] sm:$0xff]
    %v98 = vld [vmem:[%s0 + $0x8] sm:$0xff]
    %v99 = vld [vmem:[%s3] sm:$0xff]
    %v100 = vld [vmem:[%s3 + $0x8] sm:$0xff]
    %v101 = vld [vmem:[%s3 + $0x10] sm:$0xff]
    %v102 = vld [vmem:[%s3 + $0x18] sm:$0xff]
    %v103 = vld [vmem:[%s5] sm:$0x1]
    %v105 = vlaneseq
    %v106 = vshrl.u32 %v105, 7
    %v107 = vsub.s32 0, %v106
    %v108 = vrot.slane %v103, %v107
    %vm110 = vcmask 261120
    %v112 = vsel %vm110, %v97, 0
    %v115 = vsel %vm110, %v98, 0
    %117 = vmatprep.subr.mxu0 0.0
    %118 = vmatpush1.msra.mxu0 %v99
    %119 = vmatprep.subr.mxu0 0.0
    %120 = vmatpush1.msra.mxu0 %v100
    %121 = vmatprep.subr.mxu0 0.0
    %122 = vmatpush1.msra.mxu0 %v101
    %123 = vmatprep.subr.mxu0 0.0
    %124 = vmatpush1.msra.mxu0 %v102
    %125 = vmatprep.subr.mxu0 0.0
    %126 = vmatpush1.msra.mxu0 0.0
    %127 = vmatprep.subr.mxu0 0.0
    %128 = vmatpush1.msra.mxu0 0.0
    %129 = vmatprep.subr.mxu0 0.0
    %130 = vmatpush1.msra.mxu0 0.0
    %131 = vmatprep.subr.mxu0 0.0
    %132 = vmatpush1.msra.mxu0 0.0
    %133 = vmatprep.subr.mxu0 0.0
    %134 = vmatpush1.msra.mxu0 0.0
    %135 = vmatprep.subr.mxu0 0.0
    %136 = vmatpush1.msra.mxu0 0.0
    %137 = vmatprep.subr.mxu0 0.0
    %138 = vmatpush1.msra.mxu0 0.0
    %139 = vmatprep.subr.mxu0 0.0
    %140 = vmatpush1.msra.mxu0 0.0
    %141 = vmatprep.subr.mxu0 0.0
    %142 = vmatpush1.msra.mxu0 0.0
    %143 = vmatprep.subr.mxu0 0.0
    %144 = vmatpush1.msra.mxu0 0.0
    %145 = vmatprep.subr.mxu0 0.0
    %146 = vmatpush1.msra.mxu0 0.0
    %147 = vmatprep.subr.mxu0 0.0
    %148 = vmatpush1.msra.mxu0 0.0
    %149 = vmatprep.subr.mxu0 0.0
    %150 = vmatpush1.msra.mxu0 0.0
    %151 = vmatprep.subr.mxu0 0.0
    %152 = vmatpush1.msra.mxu0 0.0
    %153 = vmatprep.subr.mxu0 0.0
    %154 = vmatpush1.msra.mxu0 0.0
    %155 = vmatprep.subr.mxu0 0.0
    %156 = vmatpush1.msra.mxu0 0.0
    %157 = vmatprep.subr.mxu0 0.0
    %158 = vmatpush1.msra.mxu0 0.0
    %159 = vmatprep.subr.mxu0 0.0
    %160 = vmatpush1.msra.mxu0 0.0
    %161 = vmatprep.subr.mxu0 0.0
    %162 = vmatpush1.msra.mxu0 0.0
    %163 = vmatprep.subr.mxu0 0.0
    %164 = vmatpush1.msra.mxu0 0.0
    %165 = vmatprep.subr.mxu0 0.0
    %166 = vmatpush1.msra.mxu0 0.0
    %167 = vmatprep.subr.mxu0 0.0
    %168 = vmatpush1.msra.mxu0 0.0
    %169 = vmatprep.subr.mxu0 0.0
    %170 = vmatpush1.msra.mxu0 0.0
    %171 = vmatprep.subr.mxu0 0.0
    %172 = vmatpush1.msra.mxu0 0.0
    %173 = vmatprep.subr.mxu0 0.0
    %174 = vmatpush1.msra.mxu0 0.0
    %175 = vmatprep.subr.mxu0 0.0
    %176 = vmatpush1.msra.mxu0 0.0
    %177 = vmatprep.subr.mxu0 0.0
    %178 = vmatpush1.msra.mxu0 0.0
    %179 = vmatprep.subr.mxu0 0.0
    %180 = vmatpush1.msra.mxu0 0.0
    %181 = vmatprep.mubr.f32.mxu0 0.0
    %182 = vmatmul.mubr.f32.gmra.mrb[0].mxu0 %v112
    %v183 = vpop.f32.mrb[0].mxu0
    %v184 = vadd.f32 %v108, %v183
    %v185 = vpop.f32.mrb[0].mxu0
    %186 = vmatprep.mubr.f32.mxu0 0.0
    %187 = vmatmul.mubr.f32.gmra.mrb[0].mxu0 %v115
    %v188 = vpop.f32.mrb[0].mxu0
    %v189 = vadd.f32 %v108, %v188
    %v190 = vpop.f32.mrb[0].mxu0
    %191 = vdwg.mxu0
    %v192 = vld [vmem:[#allocation7] sm:$0xff]
    %v193 = vld [vmem:[#allocation7 + $0x8] sm:$0xff]
    %v194 = vld [vmem:[#allocation7 + $0x10] sm:$0xff]
    %v195 = vld [vmem:[#allocation7 + $0x18] sm:$0xff]
    %v196 = vld [vmem:[%s8] sm:$0x1]
    %v198 = vlaneseq
    %v199 = vshrl.u32 %v198, 7
    %v200 = vsub.s32 0, %v199
    %v201 = vrot.slane %v196, %v200
    %203 = vmatprep.subr.mxu0 0.0
    %204 = vmatpush1.msra.mxu0 %v192
    %205 = vmatprep.subr.mxu0 0.0
    %206 = vmatpush1.msra.mxu0 %v193
    %207 = vmatprep.subr.mxu0 0.0
    %208 = vmatpush1.msra.mxu0 %v194
    %209 = vmatprep.subr.mxu0 0.0
    %210 = vmatpush1.msra.mxu0 %v195
    %211 = vmatprep.subr.mxu0 0.0
    %212 = vmatpush1.msra.mxu0 0.0
    %213 = vmatprep.subr.mxu0 0.0
    %214 = vmatpush1.msra.mxu0 0.0
    %215 = vmatprep.subr.mxu0 0.0
    %216 = vmatpush1.msra.mxu0 0.0
    %217 = vmatprep.subr.mxu0 0.0
    %218 = vmatpush1.msra.mxu0 0.0
    %219 = vmatprep.subr.mxu0 0.0
    %220 = vmatpush1.msra.mxu0 0.0
    %221 = vmatprep.subr.mxu0 0.0
    %222 = vmatpush1.msra.mxu0 0.0
    %223 = vmatprep.subr.mxu0 0.0
    %224 = vmatpush1.msra.mxu0 0.0
    %225 = vmatprep.subr.mxu0 0.0
    %226 = vmatpush1.msra.mxu0 0.0
    %227 = vmatprep.subr.mxu0 0.0
    %228 = vmatpush1.msra.mxu0 0.0
    %229 = vmatprep.subr.mxu0 0.0
    %230 = vmatpush1.msra.mxu0 0.0
    %231 = vmatprep.subr.mxu0 0.0
    %232 = vmatpush1.msra.mxu0 0.0
    %233 = vmatprep.subr.mxu0 0.0
    %234 = vmatpush1.msra.mxu0 0.0
    %235 = vmatprep.subr.mxu0 0.0
    %236 = vmatpush1.msra.mxu0 0.0
    %237 = vmatprep.subr.mxu0 0.0
    %238 = vmatpush1.msra.mxu0 0.0
    %239 = vmatprep.subr.mxu0 0.0
    %240 = vmatpush1.msra.mxu0 0.0
    %241 = vmatprep.subr.mxu0 0.0
    %242 = vmatpush1.msra.mxu0 0.0
    %243 = vmatprep.subr.mxu0 0.0
    %244 = vmatpush1.msra.mxu0 0.0
    %245 = vmatprep.subr.mxu0 0.0
    %246 = vmatpush1.msra.mxu0 0.0
    %247 = vmatprep.subr.mxu0 0.0
    %248 = vmatpush1.msra.mxu0 0.0
    %249 = vmatprep.subr.mxu0 0.0
    %250 = vmatpush1.msra.mxu0 0.0
    %251 = vmatprep.subr.mxu0 0.0
    %252 = vmatpush1.msra.mxu0 0.0
    %253 = vmatprep.subr.mxu0 0.0
    %254 = vmatpush1.msra.mxu0 0.0
    %255 = vmatprep.subr.mxu0 0.0
    %256 = vmatpush1.msra.mxu0 0.0
    %257 = vmatprep.subr.mxu0 0.0
    %258 = vmatpush1.msra.mxu0 0.0
    %259 = vmatprep.subr.mxu0 0.0
    %260 = vmatpush1.msra.mxu0 0.0
    %261 = vmatprep.subr.mxu0 0.0
    %262 = vmatpush1.msra.mxu0 0.0
    %263 = vmatprep.subr.mxu0 0.0
    %264 = vmatpush1.msra.mxu0 0.0
    %265 = vmatprep.subr.mxu0 0.0
    %266 = vmatpush1.msra.mxu0 0.0
    %267 = vmatprep.mubr.f32.mxu0 0.0
    %268 = vmatmul.mubr.f32.gmra.mrb[0].mxu0 %v112
    %v269 = vpop.f32.mrb[0].mxu0
    %v270 = vadd.f32 %v201, %v269
    %v271 = vpop.f32.mrb[0].mxu0
    %272 = vmatprep.mubr.f32.mxu0 0.0
    %273 = vmatmul.mubr.f32.gmra.mrb[0].mxu0 %v115
    %v274 = vpop.f32.mrb[0].mxu0
    %v275 = vadd.f32 %v201, %v274
    %v276 = vpop.f32.mrb[0].mxu0
    %277 = vdwg.mxu0
    %v278 = vld [vmem:[#allocation2] sm:$0x3]
    %v279 = vld [vmem:[#allocation4] sm:$0x3]
    %s280 = scalar_lea.vmem [#allocation2], 2
    %v281 = vld [vmem:[%s280] sm:$0x3]
    %s282 = scalar_lea.vmem [#allocation4], 2
    %v283 = vld [vmem:[%s282] sm:$0x3]
    %vm284 = vcmask 130048
    %v286 = vsel %vm284, %v278, 0
    %288 = vmatprep.subr.mxu0 0.0
    %289 = vmatpush1.msra.mxu0 %v93
    %290 = vmatprep.subr.mxu0 0.0
    %291 = vmatpush1.msra.mxu0 %v94
    %292 = vmatprep.subr.mxu0 0.0
    %293 = vmatpush1.msra.mxu0 0.0
    %294 = vmatprep.subr.mxu0 0.0
    %295 = vmatpush1.msra.mxu0 0.0
    %296 = vmatprep.subr.mxu0 0.0
    %297 = vmatpush1.msra.mxu0 0.0
    %298 = vmatprep.subr.mxu0 0.0
    %299 = vmatpush1.msra.mxu0 0.0
    %300 = vmatprep.subr.mxu0 0.0
    %301 = vmatpush1.msra.mxu0 0.0
    %302 = vmatprep.subr.mxu0 0.0
    %303 = vmatpush1.msra.mxu0 0.0
    %304 = vmatprep.subr.mxu0 0.0
    %305 = vmatpush1.msra.mxu0 0.0
    %306 = vmatprep.subr.mxu0 0.0
    %307 = vmatpush1.msra.mxu0 0.0
    %308 = vmatprep.subr.mxu0 0.0
    %309 = vmatpush1.msra.mxu0 0.0
    %310 = vmatprep.subr.mxu0 0.0
    %311 = vmatpush1.msra.mxu0 0.0
    %312 = vmatprep.subr.mxu0 0.0
    %313 = vmatpush1.msra.mxu0 0.0
    %314 = vmatprep.subr.mxu0 0.0
    %315 = vmatpush1.msra.mxu0 0.0
    %316 = vmatprep.subr.mxu0 0.0
    %317 = vmatpush1.msra.mxu0 0.0
    %318 = vmatprep.subr.mxu0 0.0
    %319 = vmatpush1.msra.mxu0 0.0
    %320 = vmatprep.subr.mxu0 0.0
    %321 = vmatpush1.msra.mxu0 0.0
    %322 = vmatprep.subr.mxu0 0.0
    %323 = vmatpush1.msra.mxu0 0.0
    %324 = vmatprep.subr.mxu0 0.0
    %325 = vmatpush1.msra.mxu0 0.0
    %326 = vmatprep.subr.mxu0 0.0
    %327 = vmatpush1.msra.mxu0 0.0
    %328 = vmatprep.subr.mxu0 0.0
    %329 = vmatpush1.msra.mxu0 0.0
    %330 = vmatprep.subr.mxu0 0.0
    %331 = vmatpush1.msra.mxu0 0.0
    %332 = vmatprep.subr.mxu0 0.0
    %333 = vmatpush1.msra.mxu0 0.0
    %334 = vmatprep.subr.mxu0 0.0
    %335 = vmatpush1.msra.mxu0 0.0
    %336 = vmatprep.subr.mxu0 0.0
    %337 = vmatpush1.msra.mxu0 0.0
    %338 = vmatprep.subr.mxu0 0.0
    %339 = vmatpush1.msra.mxu0 0.0
    %340 = vmatprep.subr.mxu0 0.0
    %341 = vmatpush1.msra.mxu0 0.0
    %342 = vmatprep.subr.mxu0 0.0
    %343 = vmatpush1.msra.mxu0 0.0
    %344 = vmatprep.subr.mxu0 0.0
    %345 = vmatpush1.msra.mxu0 0.0
    %346 = vmatprep.subr.mxu0 0.0
    %347 = vmatpush1.msra.mxu0 0.0
    %348 = vmatprep.subr.mxu0 0.0
    %349 = vmatpush1.msra.mxu0 0.0
    %350 = vmatprep.subr.mxu0 0.0
    %351 = vmatpush1.msra.mxu0 0.0
    %352 = vmatprep.mubr.f32.mxu0 0.0
    %353 = vmatmul.mubr.f32.gmra.mrb[0].mxu0 %v286
    %v354 = vpop.f32.mrb[0].mxu0
    %v355 = vadd.f32 0.0, %v354
    %v356 = vpop.f32.mrb[0].mxu0
    %357 = vdwg.mxu0
    %v358 = vadd.f32 %v184, %v355
    %v360 = vsel %vm284, %v281, 0
    %362 = vmatprep.subr.mxu0 0.0
    %363 = vmatpush1.msra.mxu0 %v95
    %364 = vmatprep.subr.mxu0 0.0
    %365 = vmatpush1.msra.mxu0 %v96
    %366 = vmatprep.subr.mxu0 0.0
    %367 = vmatpush1.msra.mxu0 0.0
    %368 = vmatprep.subr.mxu0 0.0
    %369 = vmatpush1.msra.mxu0 0.0
    %370 = vmatprep.subr.mxu0 0.0
    %371 = vmatpush1.msra.mxu0 0.0
    %372 = vmatprep.subr.mxu0 0.0
    %373 = vmatpush1.msra.mxu0 0.0
    %374 = vmatprep.subr.mxu0 0.0
    %375 = vmatpush1.msra.mxu0 0.0
    %376 = vmatprep.subr.mxu0 0.0
    %377 = vmatpush1.msra.mxu0 0.0
    %378 = vmatprep.subr.mxu0 0.0
    %379 = vmatpush1.msra.mxu0 0.0
    %380 = vmatprep.subr.mxu0 0.0
    %381 = vmatpush1.msra.mxu0 0.0
    %382 = vmatprep.subr.mxu0 0.0
    %383 = vmatpush1.msra.mxu0 0.0
    %384 = vmatprep.subr.mxu0 0.0
    %385 = vmatpush1.msra.mxu0 0.0
    %386 = vmatprep.subr.mxu0 0.0
    %387 = vmatpush1.msra.mxu0 0.0
    %388 = vmatprep.subr.mxu0 0.0
    %389 = vmatpush1.msra.mxu0 0.0
    %390 = vmatprep.subr.mxu0 0.0
    %391 = vmatpush1.msra.mxu0 0.0
    %392 = vmatprep.subr.mxu0 0.0
    %393 = vmatpush1.msra.mxu0 0.0
    %394 = vmatprep.subr.mxu0 0.0
    %395 = vmatpush1.msra.mxu0 0.0
    %396 = vmatprep.subr.mxu0 0.0
    %397 = vmatpush1.msra.mxu0 0.0
    %398 = vmatprep.subr.mxu0 0.0
    %399 = vmatpush1.msra.mxu0 0.0
    %400 = vmatprep.subr.mxu0 0.0
    %401 = vmatpush1.msra.mxu0 0.0
    %402 = vmatprep.subr.mxu0 0.0
    %403 = vmatpush1.msra.mxu0 0.0
    %404 = vmatprep.subr.mxu0 0.0
    %405 = vmatpush1.msra.mxu0 0.0
    %406 = vmatprep.subr.mxu0 0.0
    %407 = vmatpush1.msra.mxu0 0.0
    %408 = vmatprep.subr.mxu0 0.0
    %409 = vmatpush1.msra.mxu0 0.0
    %410 = vmatprep.subr.mxu0 0.0
    %411 = vmatpush1.msra.mxu0 0.0
    %412 = vmatprep.subr.mxu0 0.0
    %413 = vmatpush1.msra.mxu0 0.0
    %414 = vmatprep.subr.mxu0 0.0
    %415 = vmatpush1.msra.mxu0 0.0
    %416 = vmatprep.subr.mxu0 0.0
    %417 = vmatpush1.msra.mxu0 0.0
    %418 = vmatprep.subr.mxu0 0.0
    %419 = vmatpush1.msra.mxu0 0.0
    %420 = vmatprep.subr.mxu0 0.0
    %421 = vmatpush1.msra.mxu0 0.0
    %422 = vmatprep.subr.mxu0 0.0
    %423 = vmatpush1.msra.mxu0 0.0
    %424 = vmatprep.subr.mxu0 0.0
    %425 = vmatpush1.msra.mxu0 0.0
    %426 = vmatprep.mubr.f32.mxu0 0.0
    %427 = vmatmul.mubr.f32.gmra.mrb[0].mxu0 %v360
    %v428 = vpop.f32.mrb[0].mxu0
    %v429 = vadd.f32 0.0, %v428
    %v430 = vpop.f32.mrb[0].mxu0
    %431 = vdwg.mxu0
    %v433 = vrot.slane %v429, 2
    %v435 = vadd.f32 %v275, %v433
    %v436 = vxor.u32 %v358, 2147483648
    %v437 = vmul.f32 %v436, 1.442695
    %v438 = vpow.pop %v437
    %v439 = vadd.f32 %v438, 1.0
    %v440 = vrcp.pop %v439
    %v441 = vmul.f32 1.0, %v440
    %v442 = vtanh.pop %v358
    %444 = vrot.lane.b32.xlu0 %v279, 16
    %v445 = vpop.permute.xlu0 %444
    %v447 = vmul.f32 %v441, %v445
    %449 = vrot.lane.b32.xlu0 %v442, 96
    %v450 = vpop.permute.xlu0 %449
    %v452 = vmul.f32 %v441, %v450
    %454 = vrot.lane.b32.xlu0 %v452, 16
    %v455 = vpop.permute.xlu0 %454
    %v457 = vadd.f32 %v447, %v455
    %v458 = vtanh.pop %v457
    %460 = vrot.lane.b32.xlu0 %v458, 32
    %v461 = vpop.permute.xlu0 %460
    %v463 = vmul.f32 %v441, %v461
    %v464 = vxor.u32 %v435, 2147483648
    %v465 = vmul.f32 %v464, 1.442695
    %v466 = vpow.pop %v465
    %v467 = vadd.f32 %v466, 1.0
    %v468 = vrcp.pop %v467
    %v469 = vmul.f32 1.0, %v468
    %v470 = vtanh.pop %v435
    %v472 = vrot.slane %v283, 2
    %473 = vrot.lane.b32.xlu0 %v472, 16
    %v474 = vpop.permute.xlu0 %473
    %v476 = vmul.f32 %v469, %v474
    %478 = vrot.lane.b32.xlu0 %v470, 96
    %v479 = vpop.permute.xlu0 %478
    %v481 = vmul.f32 %v469, %v479
    %483 = vrot.lane.b32.xlu0 %v481, 16
    %v484 = vpop.permute.xlu0 %483
    %v486 = vadd.f32 %v476, %v484
    %v487 = vtanh.pop %v486
    %489 = vrot.lane.b32.xlu0 %v487, 32
    %v490 = vpop.permute.xlu0 %489
    %v492 = vmul.f32 %v469, %v490
    %494 = vrot.lane.b32.xlu0 %v463, 80
    %v495 = vpop.permute.xlu0 %494
    %v496 = vsel %vm284, %v495, 0
    %498 = vmatprep.subr.mxu0 0.0
    %499 = vmatpush1.msra.mxu0 %v93
    %500 = vmatprep.subr.mxu0 0.0
    %501 = vmatpush1.msra.mxu0 %v94
    %502 = vmatprep.subr.mxu0 0.0
    %503 = vmatpush1.msra.mxu0 0.0
    %504 = vmatprep.subr.mxu0 0.0
    %505 = vmatpush1.msra.mxu0 0.0
    %506 = vmatprep.subr.mxu0 0.0
    %507 = vmatpush1.msra.mxu0 0.0
    %508 = vmatprep.subr.mxu0 0.0
    %509 = vmatpush1.msra.mxu0 0.0
    %510 = vmatprep.subr.mxu0 0.0
    %511 = vmatpush1.msra.mxu0 0.0
    %512 = vmatprep.subr.mxu0 0.0
    %513 = vmatpush1.msra.mxu0 0.0
    %514 = vmatprep.subr.mxu0 0.0
    %515 = vmatpush1.msra.mxu0 0.0
    %516 = vmatprep.subr.mxu0 0.0
    %517 = vmatpush1.msra.mxu0 0.0
    %518 = vmatprep.subr.mxu0 0.0
    %519 = vmatpush1.msra.mxu0 0.0
    %520 = vmatprep.subr.mxu0 0.0
    %521 = vmatpush1.msra.mxu0 0.0
    %522 = vmatprep.subr.mxu0 0.0
    %523 = vmatpush1.msra.mxu0 0.0
    %524 = vmatprep.subr.mxu0 0.0
    %525 = vmatpush1.msra.mxu0 0.0
    %526 = vmatprep.subr.mxu0 0.0
    %527 = vmatpush1.msra.mxu0 0.0
    %528 = vmatprep.subr.mxu0 0.0
    %529 = vmatpush1.msra.mxu0 0.0
    %530 = vmatprep.subr.mxu0 0.0
    %531 = vmatpush1.msra.mxu0 0.0
    %532 = vmatprep.subr.mxu0 0.0
    %533 = vmatpush1.msra.mxu0 0.0
    %534 = vmatprep.subr.mxu0 0.0
    %535 = vmatpush1.msra.mxu0 0.0
    %536 = vmatprep.subr.mxu0 0.0
    %537 = vmatpush1.msra.mxu0 0.0
    %538 = vmatprep.subr.mxu0 0.0
    %539 = vmatpush1.msra.mxu0 0.0
    %540 = vmatprep.subr.mxu0 0.0
    %541 = vmatpush1.msra.mxu0 0.0
    %542 = vmatprep.subr.mxu0 0.0
    %543 = vmatpush1.msra.mxu0 0.0
    %544 = vmatprep.subr.mxu0 0.0
    %545 = vmatpush1.msra.mxu0 0.0
    %546 = vmatprep.subr.mxu0 0.0
    %547 = vmatpush1.msra.mxu0 0.0
    %548 = vmatprep.subr.mxu0 0.0
    %549 = vmatpush1.msra.mxu0 0.0
    %550 = vmatprep.subr.mxu0 0.0
    %551 = vmatpush1.msra.mxu0 0.0
    %552 = vmatprep.subr.mxu0 0.0
    %553 = vmatpush1.msra.mxu0 0.0
    %554 = vmatprep.subr.mxu0 0.0
    %555 = vmatpush1.msra.mxu0 0.0
    %556 = vmatprep.subr.mxu0 0.0
    %557 = vmatpush1.msra.mxu0 0.0
    %558 = vmatprep.subr.mxu0 0.0
    %559 = vmatpush1.msra.mxu0 0.0
    %560 = vmatprep.subr.mxu0 0.0
    %561 = vmatpush1.msra.mxu0 0.0
    %562 = vmatprep.mubr.f32.mxu0 0.0
    %563 = vmatmul.mubr.f32.gmra.mrb[0].mxu0 %v496
    %v564 = vpop.f32.mrb[0].mxu0
    %v565 = vadd.f32 0.0, %v564
    %v566 = vpop.f32.mrb[0].mxu0
    %567 = vdwg.mxu0
    %v569 = vrot.slane %v565, 6
    %v571 = vadd.f32 %v184, %v569
    %v573 = vrot.slane %v492, 6
    %574 = vrot.lane.b32.xlu0 %v573, 80
    %v575 = vpop.permute.xlu0 %574
    %v576 = vsel %vm284, %v575, 0
    %578 = vmatprep.subr.mxu0 0.0
    %579 = vmatpush1.msra.mxu0 %v95
    %580 = vmatprep.subr.mxu0 0.0
    %581 = vmatpush1.msra.mxu0 %v96
    %582 = vmatprep.subr.mxu0 0.0
    %583 = vmatpush1.msra.mxu0 0.0
    %584 = vmatprep.subr.mxu0 0.0
    %585 = vmatpush1.msra.mxu0 0.0
    %586 = vmatprep.subr.mxu0 0.0
    %587 = vmatpush1.msra.mxu0 0.0
    %588 = vmatprep.subr.mxu0 0.0
    %589 = vmatpush1.msra.mxu0 0.0
    %590 = vmatprep.subr.mxu0 0.0
    %591 = vmatpush1.msra.mxu0 0.0
    %592 = vmatprep.subr.mxu0 0.0
    %593 = vmatpush1.msra.mxu0 0.0
    %594 = vmatprep.subr.mxu0 0.0
    %595 = vmatpush1.msra.mxu0 0.0
    %596 = vmatprep.subr.mxu0 0.0
    %597 = vmatpush1.msra.mxu0 0.0
    %598 = vmatprep.subr.mxu0 0.0
    %599 = vmatpush1.msra.mxu0 0.0
    %600 = vmatprep.subr.mxu0 0.0
    %601 = vmatpush1.msra.mxu0 0.0
    %602 = vmatprep.subr.mxu0 0.0
    %603 = vmatpush1.msra.mxu0 0.0
    %604 = vmatprep.subr.mxu0 0.0
    %605 = vmatpush1.msra.mxu0 0.0
    %606 = vmatprep.subr.mxu0 0.0
    %607 = vmatpush1.msra.mxu0 0.0
    %608 = vmatprep.subr.mxu0 0.0
    %609 = vmatpush1.msra.mxu0 0.0
    %610 = vmatprep.subr.mxu0 0.0
    %611 = vmatpush1.msra.mxu0 0.0
    %612 = vmatprep.subr.mxu0 0.0
    %613 = vmatpush1.msra.mxu0 0.0
    %614 = vmatprep.subr.mxu0 0.0
    %615 = vmatpush1.msra.mxu0 0.0
    %616 = vmatprep.subr.mxu0 0.0
    %617 = vmatpush1.msra.mxu0 0.0
    %618 = vmatprep.subr.mxu0 0.0
    %619 = vmatpush1.msra.mxu0 0.0
    %620 = vmatprep.subr.mxu0 0.0
    %621 = vmatpush1.msra.mxu0 0.0
    %622 = vmatprep.subr.mxu0 0.0
    %623 = vmatpush1.msra.mxu0 0.0
    %624 = vmatprep.subr.mxu0 0.0
    %625 = vmatpush1.msra.mxu0 0.0
    %626 = vmatprep.subr.mxu0 0.0
    %627 = vmatpush1.msra.mxu0 0.0
    %628 = vmatprep.subr.mxu0 0.0
    %629 = vmatpush1.msra.mxu0 0.0
    %630 = vmatprep.subr.mxu0 0.0
    %631 = vmatpush1.msra.mxu0 0.0
    %632 = vmatprep.subr.mxu0 0.0
    %633 = vmatpush1.msra.mxu0 0.0
    %634 = vmatprep.subr.mxu0 0.0
    %635 = vmatpush1.msra.mxu0 0.0
    %636 = vmatprep.subr.mxu0 0.0
    %637 = vmatpush1.msra.mxu0 0.0
    %638 = vmatprep.subr.mxu0 0.0
    %639 = vmatpush1.msra.mxu0 0.0
    %640 = vmatprep.subr.mxu0 0.0
    %641 = vmatpush1.msra.mxu0 0.0
    %642 = vmatprep.mubr.f32.mxu0 0.0
    %643 = vmatmul.mubr.f32.gmra.mrb[0].mxu0 %v576
    %v644 = vpop.f32.mrb[0].mxu0
    %v645 = vadd.f32 0.0, %v644
    %v646 = vpop.f32.mrb[0].mxu0
    %647 = vdwg.mxu0
    %v649 = vrot.slane %v645, 4
    %v651 = vadd.f32 %v275, %v649
    %v652 = vxor.u32 %v571, 2147483648
    %v653 = vmul.f32 %v652, 1.442695
    %v654 = vpow.pop %v653
    %v655 = vadd.f32 %v654, 1.0
    %v656 = vrcp.pop %v655
    %v657 = vmul.f32 1.0, %v656
    %v658 = vtanh.pop %v571
    %v660 = vrot.slane %v457, 6
    %v662 = vmul.f32 %v657, %v660
    %664 = vrot.lane.b32.xlu0 %v658, 96
    %v665 = vpop.permute.xlu0 %664
    %v667 = vmul.f32 %v657, %v665
    %669 = vrot.lane.b32.xlu0 %v667, 16
    %v670 = vpop.permute.xlu0 %669
    %v672 = vadd.f32 %v662, %v670
    %v673 = vtanh.pop %v672
    %675 = vrot.lane.b32.xlu0 %v673, 32
    %v676 = vpop.permute.xlu0 %675
    %v678 = vmul.f32 %v657, %v676
    %v679 = vxor.u32 %v651, 2147483648
    %v680 = vmul.f32 %v679, 1.442695
    %v681 = vpow.pop %v680
    %v682 = vadd.f32 %v681, 1.0
    %v683 = vrcp.pop %v682
    %v684 = vmul.f32 1.0, %v683
    %v685 = vtanh.pop %v651
    %v687 = vrot.slane %v486, 2
    %v689 = vmul.f32 %v684, %v687
    %691 = vrot.lane.b32.xlu0 %v685, 96
    %v692 = vpop.permute.xlu0 %691
    %v694 = vmul.f32 %v684, %v692
    %696 = vrot.lane.b32.xlu0 %v694, 16
    %v697 = vpop.permute.xlu0 %696
    %v699 = vadd.f32 %v689, %v697
    %v700 = vtanh.pop %v699
    %702 = vrot.lane.b32.xlu0 %v700, 32
    %v703 = vpop.permute.xlu0 %702
    %v705 = vmul.f32 %v684, %v703
    %v707 = vrot.slane %v678, 2
    %708 = vrot.lane.b32.xlu0 %v707, 80
    %v709 = vpop.permute.xlu0 %708
    %v710 = vsel %vm284, %v709, 0
    %712 = vmatprep.subr.mxu0 0.0
    %713 = vmatpush1.msra.mxu0 %v93
    %714 = vmatprep.subr.mxu0 0.0
    %715 = vmatpush1.msra.mxu0 %v94
    %716 = vmatprep.subr.mxu0 0.0
    %717 = vmatpush1.msra.mxu0 0.0
    %718 = vmatprep.subr.mxu0 0.0
    %719 = vmatpush1.msra.mxu0 0.0
    %720 = vmatprep.subr.mxu0 0.0
    %721 = vmatpush1.msra.mxu0 0.0
    %722 = vmatprep.subr.mxu0 0.0
    %723 = vmatpush1.msra.mxu0 0.0
    %724 = vmatprep.subr.mxu0 0.0
    %725 = vmatpush1.msra.mxu0 0.0
    %726 = vmatprep.subr.mxu0 0.0
    %727 = vmatpush1.msra.mxu0 0.0
    %728 = vmatprep.subr.mxu0 0.0
    %729 = vmatpush1.msra.mxu0 0.0
    %730 = vmatprep.subr.mxu0 0.0
    %731 = vmatpush1.msra.mxu0 0.0
    %732 = vmatprep.subr.mxu0 0.0
    %733 = vmatpush1.msra.mxu0 0.0
    %734 = vmatprep.subr.mxu0 0.0
    %735 = vmatpush1.msra.mxu0 0.0
    %736 = vmatprep.subr.mxu0 0.0
    %737 = vmatpush1.msra.mxu0 0.0
    %738 = vmatprep.subr.mxu0 0.0
    %739 = vmatpush1.msra.mxu0 0.0
    %740 = vmatprep.subr.mxu0 0.0
    %741 = vmatpush1.msra.mxu0 0.0
    %742 = vmatprep.subr.mxu0 0.0
    %743 = vmatpush1.msra.mxu0 0.0
    %744 = vmatprep.subr.mxu0 0.0
    %745 = vmatpush1.msra.mxu0 0.0
    %746 = vmatprep.subr.mxu0 0.0
    %747 = vmatpush1.msra.mxu0 0.0
    %748 = vmatprep.subr.mxu0 0.0
    %749 = vmatpush1.msra.mxu0 0.0
    %750 = vmatprep.subr.mxu0 0.0
    %751 = vmatpush1.msra.mxu0 0.0
    %752 = vmatprep.subr.mxu0 0.0
    %753 = vmatpush1.msra.mxu0 0.0
    %754 = vmatprep.subr.mxu0 0.0
    %755 = vmatpush1.msra.mxu0 0.0
    %756 = vmatprep.subr.mxu0 0.0
    %757 = vmatpush1.msra.mxu0 0.0
    %758 = vmatprep.subr.mxu0 0.0
    %759 = vmatpush1.msra.mxu0 0.0
    %760 = vmatprep.subr.mxu0 0.0
    %761 = vmatpush1.msra.mxu0 0.0
    %762 = vmatprep.subr.mxu0 0.0
    %763 = vmatpush1.msra.mxu0 0.0
    %764 = vmatprep.subr.mxu0 0.0
    %765 = vmatpush1.msra.mxu0 0.0
    %766 = vmatprep.subr.mxu0 0.0
    %767 = vmatpush1.msra.mxu0 0.0
    %768 = vmatprep.subr.mxu0 0.0
    %769 = vmatpush1.msra.mxu0 0.0
    %770 = vmatprep.subr.mxu0 0.0
    %771 = vmatpush1.msra.mxu0 0.0
    %772 = vmatprep.subr.mxu0 0.0
    %773 = vmatpush1.msra.mxu0 0.0
    %774 = vmatprep.subr.mxu0 0.0
    %775 = vmatpush1.msra.mxu0 0.0
    %776 = vmatprep.mubr.f32.mxu0 0.0
    %777 = vmatmul.mubr.f32.gmra.mrb[0].mxu0 %v710
    %v778 = vpop.f32.mrb[0].mxu0
    %v779 = vadd.f32 0.0, %v778
    %v780 = vpop.f32.mrb[0].mxu0
    %781 = vdwg.mxu0
    %v783 = vrot.slane %v779, 4
    %v785 = vadd.f32 %v184, %v783
    %v787 = vrot.slane %v705, 4
    %788 = vrot.lane.b32.xlu0 %v787, 80
    %v789 = vpop.permute.xlu0 %788
    %v790 = vsel %vm284, %v789, 0
    %792 = vmatprep.subr.mxu0 0.0
    %793 = vmatpush1.msra.mxu0 %v95
    %794 = vmatprep.subr.mxu0 0.0
    %795 = vmatpush1.msra.mxu0 %v96
    %796 = vmatprep.subr.mxu0 0.0
    %797 = vmatpush1.msra.mxu0 0.0
    %798 = vmatprep.subr.mxu0 0.0
    %799 = vmatpush1.msra.mxu0 0.0
    %800 = vmatprep.subr.mxu0 0.0
    %801 = vmatpush1.msra.mxu0 0.0
    %802 = vmatprep.subr.mxu0 0.0
    %803 = vmatpush1.msra.mxu0 0.0
    %804 = vmatprep.subr.mxu0 0.0
    %805 = vmatpush1.msra.mxu0 0.0
    %806 = vmatprep.subr.mxu0 0.0
    %807 = vmatpush1.msra.mxu0 0.0
    %808 = vmatprep.subr.mxu0 0.0
    %809 = vmatpush1.msra.mxu0 0.0
    %810 = vmatprep.subr.mxu0 0.0
    %811 = vmatpush1.msra.mxu0 0.0
    %812 = vmatprep.subr.mxu0 0.0
    %813 = vmatpush1.msra.mxu0 0.0
    %814 = vmatprep.subr.mxu0 0.0
    %815 = vmatpush1.msra.mxu0 0.0
    %816 = vmatprep.subr.mxu0 0.0
    %817 = vmatpush1.msra.mxu0 0.0
    %818 = vmatprep.subr.mxu0 0.0
    %819 = vmatpush1.msra.mxu0 0.0
    %820 = vmatprep.subr.mxu0 0.0
    %821 = vmatpush1.msra.mxu0 0.0
    %822 = vmatprep.subr.mxu0 0.0
    %823 = vmatpush1.msra.mxu0 0.0
    %824 = vmatprep.subr.mxu0 0.0
    %825 = vmatpush1.msra.mxu0 0.0
    %826 = vmatprep.subr.mxu0 0.0
    %827 = vmatpush1.msra.mxu0 0.0
    %828 = vmatprep.subr.mxu0 0.0
    %829 = vmatpush1.msra.mxu0 0.0
    %830 = vmatprep.subr.mxu0 0.0
    %831 = vmatpush1.msra.mxu0 0.0
    %832 = vmatprep.subr.mxu0 0.0
    %833 = vmatpush1.msra.mxu0 0.0
    %834 = vmatprep.subr.mxu0 0.0
    %835 = vmatpush1.msra.mxu0 0.0
    %836 = vmatprep.subr.mxu0 0.0
    %837 = vmatpush1.msra.mxu0 0.0
    %838 = vmatprep.subr.mxu0 0.0
    %839 = vmatpush1.msra.mxu0 0.0
    %840 = vmatprep.subr.mxu0 0.0
    %841 = vmatpush1.msra.mxu0 0.0
    %842 = vmatprep.subr.mxu0 0.0
    %843 = vmatpush1.msra.mxu0 0.0
    %844 = vmatprep.subr.mxu0 0.0
    %845 = vmatpush1.msra.mxu0 0.0
    %846 = vmatprep.subr.mxu0 0.0
    %847 = vmatpush1.msra.mxu0 0.0
    %848 = vmatprep.subr.mxu0 0.0
    %849 = vmatpush1.msra.mxu0 0.0
    %850 = vmatprep.subr.mxu0 0.0
    %851 = vmatpush1.msra.mxu0 0.0
    %852 = vmatprep.subr.mxu0 0.0
    %853 = vmatpush1.msra.mxu0 0.0
    %854 = vmatprep.subr.mxu0 0.0
    %855 = vmatpush1.msra.mxu0 0.0
    %856 = vmatprep.mubr.f32.mxu0 0.0
    %857 = vmatmul.mubr.f32.gmra.mrb[0].mxu0 %v790
    %v858 = vpop.f32.mrb[0].mxu0
    %v859 = vadd.f32 0.0, %v858
    %v860 = vpop.f32.mrb[0].mxu0
    %861 = vdwg.mxu0
    %v863 = vrot.slane %v859, 6
    %v865 = vadd.f32 %v275, %v863
    %v866 = vxor.u32 %v785, 2147483648
    %v867 = vmul.f32 %v866, 1.442695
    %v868 = vpow.pop %v867
    %v869 = vadd.f32 %v868, 1.0
    %v870 = vrcp.pop %v869
    %v871 = vmul.f32 1.0, %v870
    %v872 = vtanh.pop %v785
    %v874 = vrot.slane %v672, 6
    %v876 = vmul.f32 %v871, %v874
    %878 = vrot.lane.b32.xlu0 %v872, 96
    %v879 = vpop.permute.xlu0 %878
    %v881 = vmul.f32 %v871, %v879
    %883 = vrot.lane.b32.xlu0 %v881, 16
    %v884 = vpop.permute.xlu0 %883
    %v886 = vadd.f32 %v876, %v884
    %v887 = vtanh.pop %v886
    %889 = vrot.lane.b32.xlu0 %v887, 32
    %v890 = vpop.permute.xlu0 %889
    %v892 = vmul.f32 %v871, %v890
    %v893 = vxor.u32 %v865, 2147483648
    %v894 = vmul.f32 %v893, 1.442695
    %v895 = vpow.pop %v894
    %v896 = vadd.f32 %v895, 1.0
    %v897 = vrcp.pop %v896
    %v898 = vmul.f32 1.0, %v897
    %v899 = vtanh.pop %v865
    %v901 = vrot.slane %v699, 2
    %v903 = vmul.f32 %v898, %v901
    %905 = vrot.lane.b32.xlu0 %v899, 96
    %v906 = vpop.permute.xlu0 %905
    %v908 = vmul.f32 %v898, %v906
    %910 = vrot.lane.b32.xlu0 %v908, 16
    %v911 = vpop.permute.xlu0 %910
    %v913 = vadd.f32 %v903, %v911
    %v914 = vtanh.pop %v913
    %916 = vrot.lane.b32.xlu0 %v914, 32
    %v917 = vpop.permute.xlu0 %916
    %v919 = vmul.f32 %v898, %v917
    %v921 = vrot.slane %v892, 4
    %922 = vrot.lane.b32.xlu0 %v921, 80
    %v923 = vpop.permute.xlu0 %922
    %v924 = vsel %vm284, %v923, 0
    %926 = vmatprep.subr.mxu0 0.0
    %927 = vmatpush1.msra.mxu0 %v93
    %928 = vmatprep.subr.mxu0 0.0
    %929 = vmatpush1.msra.mxu0 %v94
    %930 = vmatprep.subr.mxu0 0.0
    %931 = vmatpush1.msra.mxu0 0.0
    %932 = vmatprep.subr.mxu0 0.0
    %933 = vmatpush1.msra.mxu0 0.0
    %934 = vmatprep.subr.mxu0 0.0
    %935 = vmatpush1.msra.mxu0 0.0
    %936 = vmatprep.subr.mxu0 0.0
    %937 = vmatpush1.msra.mxu0 0.0
    %938 = vmatprep.subr.mxu0 0.0
    %939 = vmatpush1.msra.mxu0 0.0
    %940 = vmatprep.subr.mxu0 0.0
    %941 = vmatpush1.msra.mxu0 0.0
    %942 = vmatprep.subr.mxu0 0.0
    %943 = vmatpush1.msra.mxu0 0.0
    %944 = vmatprep.subr.mxu0 0.0
    %945 = vmatpush1.msra.mxu0 0.0
    %946 = vmatprep.subr.mxu0 0.0
    %947 = vmatpush1.msra.mxu0 0.0
    %948 = vmatprep.subr.mxu0 0.0
    %949 = vmatpush1.msra.mxu0 0.0
    %950 = vmatprep.subr.mxu0 0.0
    %951 = vmatpush1.msra.mxu0 0.0
    %952 = vmatprep.subr.mxu0 0.0
    %953 = vmatpush1.msra.mxu0 0.0
    %954 = vmatprep.subr.mxu0 0.0
    %955 = vmatpush1.msra.mxu0 0.0
    %956 = vmatprep.subr.mxu0 0.0
    %957 = vmatpush1.msra.mxu0 0.0
    %958 = vmatprep.subr.mxu0 0.0
    %959 = vmatpush1.msra.mxu0 0.0
    %960 = vmatprep.subr.mxu0 0.0
    %961 = vmatpush1.msra.mxu0 0.0
    %962 = vmatprep.subr.mxu0 0.0
    %963 = vmatpush1.msra.mxu0 0.0
    %964 = vmatprep.subr.mxu0 0.0
    %965 = vmatpush1.msra.mxu0 0.0
    %966 = vmatprep.subr.mxu0 0.0
    %967 = vmatpush1.msra.mxu0 0.0
    %968 = vmatprep.subr.mxu0 0.0
    %969 = vmatpush1.msra.mxu0 0.0
    %970 = vmatprep.subr.mxu0 0.0
    %971 = vmatpush1.msra.mxu0 0.0
    %972 = vmatprep.subr.mxu0 0.0
    %973 = vmatpush1.msra.mxu0 0.0
    %974 = vmatprep.subr.mxu0 0.0
    %975 = vmatpush1.msra.mxu0 0.0
    %976 = vmatprep.subr.mxu0 0.0
    %977 = vmatpush1.msra.mxu0 0.0
    %978 = vmatprep.subr.mxu0 0.0
    %979 = vmatpush1.msra.mxu0 0.0
    %980 = vmatprep.subr.mxu0 0.0
    %981 = vmatpush1.msra.mxu0 0.0
    %982 = vmatprep.subr.mxu0 0.0
    %983 = vmatpush1.msra.mxu0 0.0
    %984 = vmatprep.subr.mxu0 0.0
    %985 = vmatpush1.msra.mxu0 0.0
    %986 = vmatprep.subr.mxu0 0.0
    %987 = vmatpush1.msra.mxu0 0.0
    %988 = vmatprep.subr.mxu0 0.0
    %989 = vmatpush1.msra.mxu0 0.0
    %990 = vmatprep.mubr.f32.mxu0 0.0
    %991 = vmatmul.mubr.f32.gmra.mrb[0].mxu0 %v924
    %v992 = vpop.f32.mrb[0].mxu0
    %v993 = vadd.f32 0.0, %v992
    %v994 = vpop.f32.mrb[0].mxu0
    %995 = vdwg.mxu0
    %v997 = vrot.slane %v993, 2
    %v999 = vadd.f32 %v184, %v997
    %v1001 = vrot.slane %v919, 2
    %1002 = vrot.lane.b32.xlu0 %v1001, 80
    %v1003 = vpop.permute.xlu0 %1002
    %v1004 = vsel %vm284, %v1003, 0
    %1006 = vmatprep.subr.mxu0 0.0
    %1007 = vmatpush1.msra.mxu0 %v95
    %1008 = vmatprep.subr.mxu0 0.0
    %1009 = vmatpush1.msra.mxu0 %v96
    %1010 = vmatprep.subr.mxu0 0.0
    %1011 = vmatpush1.msra.mxu0 0.0
    %1012 = vmatprep.subr.mxu0 0.0
    %1013 = vmatpush1.msra.mxu0 0.0
    %1014 = vmatprep.subr.mxu0 0.0
    %1015 = vmatpush1.msra.mxu0 0.0
    %1016 = vmatprep.subr.mxu0 0.0
    %1017 = vmatpush1.msra.mxu0 0.0
    %1018 = vmatprep.subr.mxu0 0.0
    %1019 = vmatpush1.msra.mxu0 0.0
    %1020 = vmatprep.subr.mxu0 0.0
    %1021 = vmatpush1.msra.mxu0 0.0
    %1022 = vmatprep.subr.mxu0 0.0
    %1023 = vmatpush1.msra.mxu0 0.0
    %1024 = vmatprep.subr.mxu0 0.0
    %1025 = vmatpush1.msra.mxu0 0.0
    %1026 = vmatprep.subr.mxu0 0.0
    %1027 = vmatpush1.msra.mxu0 0.0
    %1028 = vmatprep.subr.mxu0 0.0
    %1029 = vmatpush1.msra.mxu0 0.0
    %1030 = vmatprep.subr.mxu0 0.0
    %1031 = vmatpush1.msra.mxu0 0.0
    %1032 = vmatprep.subr.mxu0 0.0
    %1033 = vmatpush1.msra.mxu0 0.0
    %1034 = vmatprep.subr.mxu0 0.0
    %1035 = vmatpush1.msra.mxu0 0.0
    %1036 = vmatprep.subr.mxu0 0.0
    %1037 = vmatpush1.msra.mxu0 0.0
    %1038 = vmatprep.subr.mxu0 0.0
    %1039 = vmatpush1.msra.mxu0 0.0
    %1040 = vmatprep.subr.mxu0 0.0
    %1041 = vmatpush1.msra.mxu0 0.0
    %1042 = vmatprep.subr.mxu0 0.0
    %1043 = vmatpush1.msra.mxu0 0.0
    %1044 = vmatprep.subr.mxu0 0.0
    %1045 = vmatpush1.msra.mxu0 0.0
    %1046 = vmatprep.subr.mxu0 0.0
    %1047 = vmatpush1.msra.mxu0 0.0
    %1048 = vmatprep.subr.mxu0 0.0
    %1049 = vmatpush1.msra.mxu0 0.0
    %1050 = vmatprep.subr.mxu0 0.0
    %1051 = vmatpush1.msra.mxu0 0.0
    %1052 = vmatprep.subr.mxu0 0.0
    %1053 = vmatpush1.msra.mxu0 0.0
    %1054 = vmatprep.subr.mxu0 0.0
    %1055 = vmatpush1.msra.mxu0 0.0
    %1056 = vmatprep.subr.mxu0 0.0
    %1057 = vmatpush1.msra.mxu0 0.0
    %1058 = vmatprep.subr.mxu0 0.0
    %1059 = vmatpush1.msra.mxu0 0.0
    %1060 = vmatprep.subr.mxu0 0.0
    %1061 = vmatpush1.msra.mxu0 0.0
    %1062 = vmatprep.subr.mxu0 0.0
    %1063 = vmatpush1.msra.mxu0 0.0
    %1064 = vmatprep.subr.mxu0 0.0
    %1065 = vmatpush1.msra.mxu0 0.0
    %1066 = vmatprep.subr.mxu0 0.0
    %1067 = vmatpush1.msra.mxu0 0.0
    %1068 = vmatprep.subr.mxu0 0.0
    %1069 = vmatpush1.msra.mxu0 0.0
    %1070 = vmatprep.mubr.f32.mxu0 0.0
    %1071 = vmatmul.mubr.f32.gmra.mrb[0].mxu0 %v1004
    %v1072 = vpop.f32.mrb[0].mxu0
    %v1073 = vadd.f32 0.0, %v1072
    %v1074 = vpop.f32.mrb[0].mxu0
    %1075 = vdwg.mxu0
    %v1076 = vadd.f32 %v275, %v1073
    %v1077 = vxor.u32 %v999, 2147483648
    %v1078 = vmul.f32 %v1077, 1.442695
    %v1079 = vpow.pop %v1078
    %v1080 = vadd.f32 %v1079, 1.0
    %v1081 = vrcp.pop %v1080
    %v1082 = vmul.f32 1.0, %v1081
    %v1083 = vtanh.pop %v999
    %v1085 = vrot.slane %v886, 6
    %v1087 = vmul.f32 %v1082, %v1085
    %1089 = vrot.lane.b32.xlu0 %v1083, 96
    %v1090 = vpop.permute.xlu0 %1089
    %v1092 = vmul.f32 %v1082, %v1090
    %1094 = vrot.lane.b32.xlu0 %v1092, 16
    %v1095 = vpop.permute.xlu0 %1094
    %v1097 = vadd.f32 %v1087, %v1095
    %v1098 = vtanh.pop %v1097
    %1100 = vrot.lane.b32.xlu0 %v1098, 32
    %v1101 = vpop.permute.xlu0 %1100
    %v1103 = vmul.f32 %v1082, %v1101
    %v1104 = vxor.u32 %v1076, 2147483648
    %v1105 = vmul.f32 %v1104, 1.442695
    %v1106 = vpow.pop %v1105
    %v1107 = vadd.f32 %v1106, 1.0
    %v1108 = vrcp.pop %v1107
    %v1109 = vmul.f32 1.0, %v1108
    %v1110 = vtanh.pop %v1076
    %v1112 = vrot.slane %v913, 2
    %v1114 = vmul.f32 %v1109, %v1112
    %1116 = vrot.lane.b32.xlu0 %v1110, 96
    %v1117 = vpop.permute.xlu0 %1116
    %v1119 = vmul.f32 %v1109, %v1117
    %1121 = vrot.lane.b32.xlu0 %v1119, 16
    %v1122 = vpop.permute.xlu0 %1121
    %v1124 = vadd.f32 %v1114, %v1122
    %v1125 = vtanh.pop %v1124
    %1127 = vrot.lane.b32.xlu0 %v1125, 32
    %v1128 = vpop.permute.xlu0 %1127
    %v1130 = vmul.f32 %v1109, %v1128
    %v1132 = vrot.slane %v1103, 6
    %1133 = vrot.lane.b32.xlu0 %v1132, 80
    %v1134 = vpop.permute.xlu0 %1133
    %v1135 = vsel %vm284, %v1134, 0
    %1137 = vmatprep.subr.mxu0 0.0
    %1138 = vmatpush1.msra.mxu0 %v93
    %1139 = vmatprep.subr.mxu0 0.0
    %1140 = vmatpush1.msra.mxu0 %v94
    %1141 = vmatprep.subr.mxu0 0.0
    %1142 = vmatpush1.msra.mxu0 0.0
    %1143 = vmatprep.subr.mxu0 0.0
    %1144 = vmatpush1.msra.mxu0 0.0
    %1145 = vmatprep.subr.mxu0 0.0
    %1146 = vmatpush1.msra.mxu0 0.0
    %1147 = vmatprep.subr.mxu0 0.0
    %1148 = vmatpush1.msra.mxu0 0.0
    %1149 = vmatprep.subr.mxu0 0.0
    %1150 = vmatpush1.msra.mxu0 0.0
    %1151 = vmatprep.subr.mxu0 0.0
    %1152 = vmatpush1.msra.mxu0 0.0
    %1153 = vmatprep.subr.mxu0 0.0
    %1154 = vmatpush1.msra.mxu0 0.0
    %1155 = vmatprep.subr.mxu0 0.0
    %1156 = vmatpush1.msra.mxu0 0.0
    %1157 = vmatprep.subr.mxu0 0.0
    %1158 = vmatpush1.msra.mxu0 0.0
    %1159 = vmatprep.subr.mxu0 0.0
    %1160 = vmatpush1.msra.mxu0 0.0
    %1161 = vmatprep.subr.mxu0 0.0
    %1162 = vmatpush1.msra.mxu0 0.0
    %1163 = vmatprep.subr.mxu0 0.0
    %1164 = vmatpush1.msra.mxu0 0.0
    %1165 = vmatprep.subr.mxu0 0.0
    %1166 = vmatpush1.msra.mxu0 0.0
    %1167 = vmatprep.subr.mxu0 0.0
    %1168 = vmatpush1.msra.mxu0 0.0
    %1169 = vmatprep.subr.mxu0 0.0
    %1170 = vmatpush1.msra.mxu0 0.0
    %1171 = vmatprep.subr.mxu0 0.0
    %1172 = vmatpush1.msra.mxu0 0.0
    %1173 = vmatprep.subr.mxu0 0.0
    %1174 = vmatpush1.msra.mxu0 0.0
    %1175 = vmatprep.subr.mxu0 0.0
    %1176 = vmatpush1.msra.mxu0 0.0
    %1177 = vmatprep.subr.mxu0 0.0
    %1178 = vmatpush1.msra.mxu0 0.0
    %1179 = vmatprep.subr.mxu0 0.0
    %1180 = vmatpush1.msra.mxu0 0.0
    %1181 = vmatprep.subr.mxu0 0.0
    %1182 = vmatpush1.msra.mxu0 0.0
    %1183 = vmatprep.subr.mxu0 0.0
    %1184 = vmatpush1.msra.mxu0 0.0
    %1185 = vmatprep.subr.mxu0 0.0
    %1186 = vmatpush1.msra.mxu0 0.0
    %1187 = vmatprep.subr.mxu0 0.0
    %1188 = vmatpush1.msra.mxu0 0.0
    %1189 = vmatprep.subr.mxu0 0.0
    %1190 = vmatpush1.msra.mxu0 0.0
    %1191 = vmatprep.subr.mxu0 0.0
    %1192 = vmatpush1.msra.mxu0 0.0
    %1193 = vmatprep.subr.mxu0 0.0
    %1194 = vmatpush1.msra.mxu0 0.0
    %1195 = vmatprep.subr.mxu0 0.0
    %1196 = vmatpush1.msra.mxu0 0.0
    %1197 = vmatprep.subr.mxu0 0.0
    %1198 = vmatpush1.msra.mxu0 0.0
    %1199 = vmatprep.subr.mxu0 0.0
    %1200 = vmatpush1.msra.mxu0 0.0
    %1201 = vmatprep.mubr.f32.mxu0 0.0
    %1202 = vmatmul.mubr.f32.gmra.mrb[0].mxu0 %v1135
    %v1203 = vpop.f32.mrb[0].mxu0
    %v1204 = vadd.f32 0.0, %v1203
    %v1205 = vpop.f32.mrb[0].mxu0
    %1206 = vdwg.mxu0
    %v1207 = vadd.f32 %v189, %v1204
    %1209 = vrot.lane.b32.xlu0 %v1130, 80
    %v1210 = vpop.permute.xlu0 %1209
    %v1211 = vsel %vm284, %v1210, 0
    %1213 = vmatprep.subr.mxu0 0.0
    %1214 = vmatpush1.msra.mxu0 %v95
    %1215 = vmatprep.subr.mxu0 0.0
    %1216 = vmatpush1.msra.mxu0 %v96
    %1217 = vmatprep.subr.mxu0 0.0
    %1218 = vmatpush1.msra.mxu0 0.0
    %1219 = vmatprep.subr.mxu0 0.0
    %1220 = vmatpush1.msra.mxu0 0.0
    %1221 = vmatprep.subr.mxu0 0.0
    %1222 = vmatpush1.msra.mxu0 0.0
    %1223 = vmatprep.subr.mxu0 0.0
    %1224 = vmatpush1.msra.mxu0 0.0
    %1225 = vmatprep.subr.mxu0 0.0
    %1226 = vmatpush1.msra.mxu0 0.0
    %1227 = vmatprep.subr.mxu0 0.0
    %1228 = vmatpush1.msra.mxu0 0.0
    %1229 = vmatprep.subr.mxu0 0.0
    %1230 = vmatpush1.msra.mxu0 0.0
    %1231 = vmatprep.subr.mxu0 0.0
    %1232 = vmatpush1.msra.mxu0 0.0
    %1233 = vmatprep.subr.mxu0 0.0
    %1234 = vmatpush1.msra.mxu0 0.0
    %1235 = vmatprep.subr.mxu0 0.0
    %1236 = vmatpush1.msra.mxu0 0.0
    %1237 = vmatprep.subr.mxu0 0.0
    %1238 = vmatpush1.msra.mxu0 0.0
    %1239 = vmatprep.subr.mxu0 0.0
    %1240 = vmatpush1.msra.mxu0 0.0
    %1241 = vmatprep.subr.mxu0 0.0
    %1242 = vmatpush1.msra.mxu0 0.0
    %1243 = vmatprep.subr.mxu0 0.0
    %1244 = vmatpush1.msra.mxu0 0.0
    %1245 = vmatprep.subr.mxu0 0.0
    %1246 = vmatpush1.msra.mxu0 0.0
    %1247 = vmatprep.subr.mxu0 0.0
    %1248 = vmatpush1.msra.mxu0 0.0
    %1249 = vmatprep.subr.mxu0 0.0
    %1250 = vmatpush1.msra.mxu0 0.0
    %1251 = vmatprep.subr.mxu0 0.0
    %1252 = vmatpush1.msra.mxu0 0.0
    %1253 = vmatprep.subr.mxu0 0.0
    %1254 = vmatpush1.msra.mxu0 0.0
    %1255 = vmatprep.subr.mxu0 0.0
    %1256 = vmatpush1.msra.mxu0 0.0
    %1257 = vmatprep.subr.mxu0 0.0
    %1258 = vmatpush1.msra.mxu0 0.0
    %1259 = vmatprep.subr.mxu0 0.0
    %1260 = vmatpush1.msra.mxu0 0.0
    %1261 = vmatprep.subr.mxu0 0.0
    %1262 = vmatpush1.msra.mxu0 0.0
    %1263 = vmatprep.subr.mxu0 0.0
    %1264 = vmatpush1.msra.mxu0 0.0
    %1265 = vmatprep.subr.mxu0 0.0
    %1266 = vmatpush1.msra.mxu0 0.0
    %1267 = vmatprep.subr.mxu0 0.0
    %1268 = vmatpush1.msra.mxu0 0.0
    %1269 = vmatprep.subr.mxu0 0.0
    %1270 = vmatpush1.msra.mxu0 0.0
    %1271 = vmatprep.subr.mxu0 0.0
    %1272 = vmatpush1.msra.mxu0 0.0
    %1273 = vmatprep.subr.mxu0 0.0
    %1274 = vmatpush1.msra.mxu0 0.0
    %1275 = vmatprep.subr.mxu0 0.0
    %1276 = vmatpush1.msra.mxu0 0.0
    %1277 = vmatprep.mubr.f32.mxu0 0.0
    %1278 = vmatmul.mubr.f32.gmra.mrb[0].mxu0 %v1211
    %v1279 = vpop.f32.mrb[0].mxu0
    %v1280 = vadd.f32 0.0, %v1279
    %v1281 = vpop.f32.mrb[0].mxu0
    %1282 = vdwg.mxu0
    %v1284 = vrot.slane %v1280, 2
    %v1286 = vadd.f32 %v270, %v1284
    %v1287 = vxor.u32 %v1207, 2147483648
    %v1288 = vmul.f32 %v1287, 1.442695
    %v1289 = vpow.pop %v1288
    %v1290 = vadd.f32 %v1289, 1.0
    %v1291 = vrcp.pop %v1290
    %v1292 = vmul.f32 1.0, %v1291
    %v1293 = vtanh.pop %v1207
    %v1295 = vrot.slane %v1097, 6
    %v1297 = vmul.f32 %v1292, %v1295
    %1299 = vrot.lane.b32.xlu0 %v1293, 96
    %v1300 = vpop.permute.xlu0 %1299
    %v1302 = vmul.f32 %v1292, %v1300
    %1304 = vrot.lane.b32.xlu0 %v1302, 16
    %v1305 = vpop.permute.xlu0 %1304
    %v1307 = vadd.f32 %v1297, %v1305
    %v1308 = vtanh.pop %v1307
    %1310 = vrot.lane.b32.xlu0 %v1308, 32
    %v1311 = vpop.permute.xlu0 %1310
    %v1313 = vmul.f32 %v1292, %v1311
    %v1314 = vxor.u32 %v1286, 2147483648
    %v1315 = vmul.f32 %v1314, 1.442695
    %v1316 = vpow.pop %v1315
    %v1317 = vadd.f32 %v1316, 1.0
    %v1318 = vrcp.pop %v1317
    %v1319 = vmul.f32 1.0, %v1318
    %v1320 = vtanh.pop %v1286
    %v1322 = vrot.slane %v1124, 2
    %v1324 = vmul.f32 %v1319, %v1322
    %1326 = vrot.lane.b32.xlu0 %v1320, 96
    %v1327 = vpop.permute.xlu0 %1326
    %v1329 = vmul.f32 %v1319, %v1327
    %1331 = vrot.lane.b32.xlu0 %v1329, 16
    %v1332 = vpop.permute.xlu0 %1331
    %v1334 = vadd.f32 %v1324, %v1332
    %v1335 = vtanh.pop %v1334
    %1337 = vrot.lane.b32.xlu0 %v1335, 32
    %v1338 = vpop.permute.xlu0 %1337
    %v1340 = vmul.f32 %v1319, %v1338
    %1342 = vrot.lane.b32.xlu0 %v1313, 80
    %v1343 = vpop.permute.xlu0 %1342
    %v1344 = vsel %vm284, %v1343, 0
    %1346 = vmatprep.subr.mxu0 0.0
    %1347 = vmatpush1.msra.mxu0 %v93
    %1348 = vmatprep.subr.mxu0 0.0
    %1349 = vmatpush1.msra.mxu0 %v94
    %1350 = vmatprep.subr.mxu0 0.0
    %1351 = vmatpush1.msra.mxu0 0.0
    %1352 = vmatprep.subr.mxu0 0.0
    %1353 = vmatpush1.msra.mxu0 0.0
    %1354 = vmatprep.subr.mxu0 0.0
    %1355 = vmatpush1.msra.mxu0 0.0
    %1356 = vmatprep.subr.mxu0 0.0
    %1357 = vmatpush1.msra.mxu0 0.0
    %1358 = vmatprep.subr.mxu0 0.0
    %1359 = vmatpush1.msra.mxu0 0.0
    %1360 = vmatprep.subr.mxu0 0.0
    %1361 = vmatpush1.msra.mxu0 0.0
    %1362 = vmatprep.subr.mxu0 0.0
    %1363 = vmatpush1.msra.mxu0 0.0
    %1364 = vmatprep.subr.mxu0 0.0
    %1365 = vmatpush1.msra.mxu0 0.0
    %1366 = vmatprep.subr.mxu0 0.0
    %1367 = vmatpush1.msra.mxu0 0.0
    %1368 = vmatprep.subr.mxu0 0.0
    %1369 = vmatpush1.msra.mxu0 0.0
    %1370 = vmatprep.subr.mxu0 0.0
    %1371 = vmatpush1.msra.mxu0 0.0
    %1372 = vmatprep.subr.mxu0 0.0
    %1373 = vmatpush1.msra.mxu0 0.0
    %1374 = vmatprep.subr.mxu0 0.0
    %1375 = vmatpush1.msra.mxu0 0.0
    %1376 = vmatprep.subr.mxu0 0.0
    %1377 = vmatpush1.msra.mxu0 0.0
    %1378 = vmatprep.subr.mxu0 0.0
    %1379 = vmatpush1.msra.mxu0 0.0
    %1380 = vmatprep.subr.mxu0 0.0
    %1381 = vmatpush1.msra.mxu0 0.0
    %1382 = vmatprep.subr.mxu0 0.0
    %1383 = vmatpush1.msra.mxu0 0.0
    %1384 = vmatprep.subr.mxu0 0.0
    %1385 = vmatpush1.msra.mxu0 0.0
    %1386 = vmatprep.subr.mxu0 0.0
    %1387 = vmatpush1.msra.mxu0 0.0
    %1388 = vmatprep.subr.mxu0 0.0
    %1389 = vmatpush1.msra.mxu0 0.0
    %1390 = vmatprep.subr.mxu0 0.0
    %1391 = vmatpush1.msra.mxu0 0.0
    %1392 = vmatprep.subr.mxu0 0.0
    %1393 = vmatpush1.msra.mxu0 0.0
    %1394 = vmatprep.subr.mxu0 0.0
    %1395 = vmatpush1.msra.mxu0 0.0
    %1396 = vmatprep.subr.mxu0 0.0
    %1397 = vmatpush1.msra.mxu0 0.0
    %1398 = vmatprep.subr.mxu0 0.0
    %1399 = vmatpush1.msra.mxu0 0.0
    %1400 = vmatprep.subr.mxu0 0.0
    %1401 = vmatpush1.msra.mxu0 0.0
    %1402 = vmatprep.subr.mxu0 0.0
    %1403 = vmatpush1.msra.mxu0 0.0
    %1404 = vmatprep.subr.mxu0 0.0
    %1405 = vmatpush1.msra.mxu0 0.0
    %1406 = vmatprep.subr.mxu0 0.0
    %1407 = vmatpush1.msra.mxu0 0.0
    %1408 = vmatprep.subr.mxu0 0.0
    %1409 = vmatpush1.msra.mxu0 0.0
    %1410 = vmatprep.mubr.f32.mxu0 0.0
    %1411 = vmatmul.mubr.f32.gmra.mrb[0].mxu0 %v1344
    %v1412 = vpop.f32.mrb[0].mxu0
    %v1413 = vadd.f32 0.0, %v1412
    %v1414 = vpop.f32.mrb[0].mxu0
    %1415 = vdwg.mxu0
    %v1417 = vrot.slane %v1413, 6
    %v1419 = vadd.f32 %v189, %v1417
    %v1421 = vrot.slane %v1340, 6
    %1422 = vrot.lane.b32.xlu0 %v1421, 80
    %v1423 = vpop.permute.xlu0 %1422
    %v1424 = vsel %vm284, %v1423, 0
    %1426 = vmatprep.subr.mxu0 0.0
    %1427 = vmatpush1.msra.mxu0 %v95
    %1428 = vmatprep.subr.mxu0 0.0
    %1429 = vmatpush1.msra.mxu0 %v96
    %1430 = vmatprep.subr.mxu0 0.0
    %1431 = vmatpush1.msra.mxu0 0.0
    %1432 = vmatprep.subr.mxu0 0.0
    %1433 = vmatpush1.msra.mxu0 0.0
    %1434 = vmatprep.subr.mxu0 0.0
    %1435 = vmatpush1.msra.mxu0 0.0
    %1436 = vmatprep.subr.mxu0 0.0
    %1437 = vmatpush1.msra.mxu0 0.0
    %1438 = vmatprep.subr.mxu0 0.0
    %1439 = vmatpush1.msra.mxu0 0.0
    %1440 = vmatprep.subr.mxu0 0.0
    %1441 = vmatpush1.msra.mxu0 0.0
    %1442 = vmatprep.subr.mxu0 0.0
    %1443 = vmatpush1.msra.mxu0 0.0
    %1444 = vmatprep.subr.mxu0 0.0
    %1445 = vmatpush1.msra.mxu0 0.0
    %1446 = vmatprep.subr.mxu0 0.0
    %1447 = vmatpush1.msra.mxu0 0.0
    %1448 = vmatprep.subr.mxu0 0.0
    %1449 = vmatpush1.msra.mxu0 0.0
    %1450 = vmatprep.subr.mxu0 0.0
    %1451 = vmatpush1.msra.mxu0 0.0
    %1452 = vmatprep.subr.mxu0 0.0
    %1453 = vmatpush1.msra.mxu0 0.0
    %1454 = vmatprep.subr.mxu0 0.0
    %1455 = vmatpush1.msra.mxu0 0.0
    %1456 = vmatprep.subr.mxu0 0.0
    %1457 = vmatpush1.msra.mxu0 0.0
    %1458 = vmatprep.subr.mxu0 0.0
    %1459 = vmatpush1.msra.mxu0 0.0
    %1460 = vmatprep.subr.mxu0 0.0
    %1461 = vmatpush1.msra.mxu0 0.0
    %1462 = vmatprep.subr.mxu0 0.0
    %1463 = vmatpush1.msra.mxu0 0.0
    %1464 = vmatprep.subr.mxu0 0.0
    %1465 = vmatpush1.msra.mxu0 0.0
    %1466 = vmatprep.subr.mxu0 0.0
    %1467 = vmatpush1.msra.mxu0 0.0
    %1468 = vmatprep.subr.mxu0 0.0
    %1469 = vmatpush1.msra.mxu0 0.0
    %1470 = vmatprep.subr.mxu0 0.0
    %1471 = vmatpush1.msra.mxu0 0.0
    %1472 = vmatprep.subr.mxu0 0.0
    %1473 = vmatpush1.msra.mxu0 0.0
    %1474 = vmatprep.subr.mxu0 0.0
    %1475 = vmatpush1.msra.mxu0 0.0
    %1476 = vmatprep.subr.mxu0 0.0
    %1477 = vmatpush1.msra.mxu0 0.0
    %1478 = vmatprep.subr.mxu0 0.0
    %1479 = vmatpush1.msra.mxu0 0.0
    %1480 = vmatprep.subr.mxu0 0.0
    %1481 = vmatpush1.msra.mxu0 0.0
    %1482 = vmatprep.subr.mxu0 0.0
    %1483 = vmatpush1.msra.mxu0 0.0
    %1484 = vmatprep.subr.mxu0 0.0
    %1485 = vmatpush1.msra.mxu0 0.0
    %1486 = vmatprep.subr.mxu0 0.0
    %1487 = vmatpush1.msra.mxu0 0.0
    %1488 = vmatprep.subr.mxu0 0.0
    %1489 = vmatpush1.msra.mxu0 0.0
    %1490 = vmatprep.mubr.f32.mxu0 0.0
    %1491 = vmatmul.mubr.f32.gmra.mrb[0].mxu0 %v1424
    %v1492 = vpop.f32.mrb[0].mxu0
    %v1493 = vadd.f32 0.0, %v1492
    %v1494 = vpop.f32.mrb[0].mxu0
    %1495 = vdwg.mxu0
    %v1497 = vrot.slane %v1493, 4
    %v1499 = vadd.f32 %v270, %v1497
    %v1500 = vxor.u32 %v1419, 2147483648
    %v1501 = vmul.f32 %v1500, 1.442695
    %v1502 = vpow.pop %v1501
    %v1503 = vadd.f32 %v1502, 1.0
    %v1504 = vrcp.pop %v1503
    %v1505 = vmul.f32 1.0, %v1504
    %v1506 = vtanh.pop %v1419
    %v1508 = vrot.slane %v1307, 6
    %v1510 = vmul.f32 %v1505, %v1508
    %1512 = vrot.lane.b32.xlu0 %v1506, 96
    %v1513 = vpop.permute.xlu0 %1512
    %v1515 = vmul.f32 %v1505, %v1513
    %1517 = vrot.lane.b32.xlu0 %v1515, 16
    %v1518 = vpop.permute.xlu0 %1517
    %v1520 = vadd.f32 %v1510, %v1518
    %v1521 = vtanh.pop %v1520
    %1523 = vrot.lane.b32.xlu0 %v1521, 32
    %v1524 = vpop.permute.xlu0 %1523
    %v1526 = vmul.f32 %v1505, %v1524
    %v1527 = vxor.u32 %v1499, 2147483648
    %v1528 = vmul.f32 %v1527, 1.442695
    %v1529 = vpow.pop %v1528
    %v1530 = vadd.f32 %v1529, 1.0
    %v1531 = vrcp.pop %v1530
    %v1532 = vmul.f32 1.0, %v1531
    %v1533 = vtanh.pop %v1499
    %v1535 = vrot.slane %v1334, 2
    %v1537 = vmul.f32 %v1532, %v1535
    %1539 = vrot.lane.b32.xlu0 %v1533, 96
    %v1540 = vpop.permute.xlu0 %1539
    %v1542 = vmul.f32 %v1532, %v1540
    %1544 = vrot.lane.b32.xlu0 %v1542, 16
    %v1545 = vpop.permute.xlu0 %1544
    %v1547 = vadd.f32 %v1537, %v1545
    %v1548 = vtanh.pop %v1547
    %1550 = vrot.lane.b32.xlu0 %v1548, 32
    %v1551 = vpop.permute.xlu0 %1550
    %v1553 = vmul.f32 %v1532, %v1551
    %v1555 = vrot.slane %v1526, 2
    %1556 = vrot.lane.b32.xlu0 %v1555, 80
    %v1557 = vpop.permute.xlu0 %1556
    %v1558 = vsel %vm284, %v1557, 0
    %1560 = vmatprep.subr.mxu0 0.0
    %1561 = vmatpush1.msra.mxu0 %v93
    %1562 = vmatprep.subr.mxu0 0.0
    %1563 = vmatpush1.msra.mxu0 %v94
    %1564 = vmatprep.subr.mxu0 0.0
    %1565 = vmatpush1.msra.mxu0 0.0
    %1566 = vmatprep.subr.mxu0 0.0
    %1567 = vmatpush1.msra.mxu0 0.0
    %1568 = vmatprep.subr.mxu0 0.0
    %1569 = vmatpush1.msra.mxu0 0.0
    %1570 = vmatprep.subr.mxu0 0.0
    %1571 = vmatpush1.msra.mxu0 0.0
    %1572 = vmatprep.subr.mxu0 0.0
    %1573 = vmatpush1.msra.mxu0 0.0
    %1574 = vmatprep.subr.mxu0 0.0
    %1575 = vmatpush1.msra.mxu0 0.0
    %1576 = vmatprep.subr.mxu0 0.0
    %1577 = vmatpush1.msra.mxu0 0.0
    %1578 = vmatprep.subr.mxu0 0.0
    %1579 = vmatpush1.msra.mxu0 0.0
    %1580 = vmatprep.subr.mxu0 0.0
    %1581 = vmatpush1.msra.mxu0 0.0
    %1582 = vmatprep.subr.mxu0 0.0
    %1583 = vmatpush1.msra.mxu0 0.0
    %1584 = vmatprep.subr.mxu0 0.0
    %1585 = vmatpush1.msra.mxu0 0.0
    %1586 = vmatprep.subr.mxu0 0.0
    %1587 = vmatpush1.msra.mxu0 0.0
    %1588 = vmatprep.subr.mxu0 0.0
    %1589 = vmatpush1.msra.mxu0 0.0
    %1590 = vmatprep.subr.mxu0 0.0
    %1591 = vmatpush1.msra.mxu0 0.0
    %1592 = vmatprep.subr.mxu0 0.0
    %1593 = vmatpush1.msra.mxu0 0.0
    %1594 = vmatprep.subr.mxu0 0.0
    %1595 = vmatpush1.msra.mxu0 0.0
    %1596 = vmatprep.subr.mxu0 0.0
    %1597 = vmatpush1.msra.mxu0 0.0
    %1598 = vmatprep.subr.mxu0 0.0
    %1599 = vmatpush1.msra.mxu0 0.0
    %1600 = vmatprep.subr.mxu0 0.0
    %1601 = vmatpush1.msra.mxu0 0.0
    %1602 = vmatprep.subr.mxu0 0.0
    %1603 = vmatpush1.msra.mxu0 0.0
    %1604 = vmatprep.subr.mxu0 0.0
    %1605 = vmatpush1.msra.mxu0 0.0
    %1606 = vmatprep.subr.mxu0 0.0
    %1607 = vmatpush1.msra.mxu0 0.0
    %1608 = vmatprep.subr.mxu0 0.0
    %1609 = vmatpush1.msra.mxu0 0.0
    %1610 = vmatprep.subr.mxu0 0.0
    %1611 = vmatpush1.msra.mxu0 0.0
    %1612 = vmatprep.subr.mxu0 0.0
    %1613 = vmatpush1.msra.mxu0 0.0
    %1614 = vmatprep.subr.mxu0 0.0
    %1615 = vmatpush1.msra.mxu0 0.0
    %1616 = vmatprep.subr.mxu0 0.0
    %1617 = vmatpush1.msra.mxu0 0.0
    %1618 = vmatprep.subr.mxu0 0.0
    %1619 = vmatpush1.msra.mxu0 0.0
    %1620 = vmatprep.subr.mxu0 0.0
    %1621 = vmatpush1.msra.mxu0 0.0
    %1622 = vmatprep.subr.mxu0 0.0
    %1623 = vmatpush1.msra.mxu0 0.0
    %1624 = vmatprep.mubr.f32.mxu0 0.0
    %1625 = vmatmul.mubr.f32.gmra.mrb[0].mxu0 %v1558
    %v1626 = vpop.f32.mrb[0].mxu0
    %v1627 = vadd.f32 0.0, %v1626
    %v1628 = vpop.f32.mrb[0].mxu0
    %1629 = vdwg.mxu0
    %v1631 = vrot.slane %v1627, 4
    %v1633 = vadd.f32 %v189, %v1631
    %v1635 = vrot.slane %v1553, 4
    %1636 = vrot.lane.b32.xlu0 %v1635, 80
    %v1637 = vpop.permute.xlu0 %1636
    %v1638 = vsel %vm284, %v1637, 0
    %1640 = vmatprep.subr.mxu0 0.0
    %1641 = vmatpush1.msra.mxu0 %v95
    %1642 = vmatprep.subr.mxu0 0.0
    %1643 = vmatpush1.msra.mxu0 %v96
    %1644 = vmatprep.subr.mxu0 0.0
    %1645 = vmatpush1.msra.mxu0 0.0
    %1646 = vmatprep.subr.mxu0 0.0
    %1647 = vmatpush1.msra.mxu0 0.0
    %1648 = vmatprep.subr.mxu0 0.0
    %1649 = vmatpush1.msra.mxu0 0.0
    %1650 = vmatprep.subr.mxu0 0.0
    %1651 = vmatpush1.msra.mxu0 0.0
    %1652 = vmatprep.subr.mxu0 0.0
    %1653 = vmatpush1.msra.mxu0 0.0
    %1654 = vmatprep.subr.mxu0 0.0
    %1655 = vmatpush1.msra.mxu0 0.0
    %1656 = vmatprep.subr.mxu0 0.0
    %1657 = vmatpush1.msra.mxu0 0.0
    %1658 = vmatprep.subr.mxu0 0.0
    %1659 = vmatpush1.msra.mxu0 0.0
    %1660 = vmatprep.subr.mxu0 0.0
    %1661 = vmatpush1.msra.mxu0 0.0
    %1662 = vmatprep.subr.mxu0 0.0
    %1663 = vmatpush1.msra.mxu0 0.0
    %1664 = vmatprep.subr.mxu0 0.0
    %1665 = vmatpush1.msra.mxu0 0.0
    %1666 = vmatprep.subr.mxu0 0.0
    %1667 = vmatpush1.msra.mxu0 0.0
    %1668 = vmatprep.subr.mxu0 0.0
    %1669 = vmatpush1.msra.mxu0 0.0
    %1670 = vmatprep.subr.mxu0 0.0
    %1671 = vmatpush1.msra.mxu0 0.0
    %1672 = vmatprep.subr.mxu0 0.0
    %1673 = vmatpush1.msra.mxu0 0.0
    %1674 = vmatprep.subr.mxu0 0.0
    %1675 = vmatpush1.msra.mxu0 0.0
    %1676 = vmatprep.subr.mxu0 0.0
    %1677 = vmatpush1.msra.mxu0 0.0
    %1678 = vmatprep.subr.mxu0 0.0
    %1679 = vmatpush1.msra.mxu0 0.0
    %1680 = vmatprep.subr.mxu0 0.0
    %1681 = vmatpush1.msra.mxu0 0.0
    %1682 = vmatprep.subr.mxu0 0.0
    %1683 = vmatpush1.msra.mxu0 0.0
    %1684 = vmatprep.subr.mxu0 0.0
    %1685 = vmatpush1.msra.mxu0 0.0
    %1686 = vmatprep.subr.mxu0 0.0
    %1687 = vmatpush1.msra.mxu0 0.0
    %1688 = vmatprep.subr.mxu0 0.0
    %1689 = vmatpush1.msra.mxu0 0.0
    %1690 = vmatprep.subr.mxu0 0.0
    %1691 = vmatpush1.msra.mxu0 0.0
    %1692 = vmatprep.subr.mxu0 0.0
    %1693 = vmatpush1.msra.mxu0 0.0
    %1694 = vmatprep.subr.mxu0 0.0
    %1695 = vmatpush1.msra.mxu0 0.0
    %1696 = vmatprep.subr.mxu0 0.0
    %1697 = vmatpush1.msra.mxu0 0.0
    %1698 = vmatprep.subr.mxu0 0.0
    %1699 = vmatpush1.msra.mxu0 0.0
    %1700 = vmatprep.subr.mxu0 0.0
    %1701 = vmatpush1.msra.mxu0 0.0
    %1702 = vmatprep.subr.mxu0 0.0
    %1703 = vmatpush1.msra.mxu0 0.0
    %1704 = vmatprep.mubr.f32.mxu0 0.0
    %1705 = vmatmul.mubr.f32.gmra.mrb[0].mxu0 %v1638
    %v1706 = vpop.f32.mrb[0].mxu0
    %v1707 = vadd.f32 0.0, %v1706
    %v1708 = vpop.f32.mrb[0].mxu0
    %1709 = vdwg.mxu0
    %v1711 = vrot.slane %v1707, 6
    %v1713 = vadd.f32 %v270, %v1711
    %v1714 = vxor.u32 %v1633, 2147483648
    %v1715 = vmul.f32 %v1714, 1.442695
    %v1716 = vpow.pop %v1715
    %v1717 = vadd.f32 %v1716, 1.0
    %v1718 = vrcp.pop %v1717
    %v1719 = vmul.f32 1.0, %v1718
    %v1720 = vtanh.pop %v1633
    %v1722 = vrot.slane %v1520, 6
    %v1724 = vmul.f32 %v1719, %v1722
    %1726 = vrot.lane.b32.xlu0 %v1720, 96
    %v1727 = vpop.permute.xlu0 %1726
    %v1729 = vmul.f32 %v1719, %v1727
    %1731 = vrot.lane.b32.xlu0 %v1729, 16
    %v1732 = vpop.permute.xlu0 %1731
    %v1734 = vadd.f32 %v1724, %v1732
    %v1735 = vtanh.pop %v1734
    %1737 = vrot.lane.b32.xlu0 %v1735, 32
    %v1738 = vpop.permute.xlu0 %1737
    %v1740 = vmul.f32 %v1719, %v1738
    %v1741 = vxor.u32 %v1713, 2147483648
    %v1742 = vmul.f32 %v1741, 1.442695
    %v1743 = vpow.pop %v1742
    %v1744 = vadd.f32 %v1743, 1.0
    %v1745 = vrcp.pop %v1744
    %v1746 = vmul.f32 1.0, %v1745
    %v1747 = vtanh.pop %v1713
    %v1749 = vrot.slane %v1547, 2
    %v1751 = vmul.f32 %v1746, %v1749
    %1753 = vrot.lane.b32.xlu0 %v1747, 96
    %v1754 = vpop.permute.xlu0 %1753
    %v1756 = vmul.f32 %v1746, %v1754
    %1758 = vrot.lane.b32.xlu0 %v1756, 16
    %v1759 = vpop.permute.xlu0 %1758
    %v1761 = vadd.f32 %v1751, %v1759
    %v1762 = vtanh.pop %v1761
    %1764 = vrot.lane.b32.xlu0 %v1762, 32
    %v1765 = vpop.permute.xlu0 %1764
    %v1767 = vmul.f32 %v1746, %v1765
    %v1769 = vrot.slane %v1740, 4
    %1770 = vrot.lane.b32.xlu0 %v1769, 80
    %v1771 = vpop.permute.xlu0 %1770
    %v1772 = vsel %vm284, %v1771, 0
    %1774 = vmatprep.subr.mxu0 0.0
    %1775 = vmatpush1.msra.mxu0 %v93
    %1776 = vmatprep.subr.mxu0 0.0
    %1777 = vmatpush1.msra.mxu0 %v94
    %1778 = vmatprep.subr.mxu0 0.0
    %1779 = vmatpush1.msra.mxu0 0.0
    %1780 = vmatprep.subr.mxu0 0.0
    %1781 = vmatpush1.msra.mxu0 0.0
    %1782 = vmatprep.subr.mxu0 0.0
    %1783 = vmatpush1.msra.mxu0 0.0
    %1784 = vmatprep.subr.mxu0 0.0
    %1785 = vmatpush1.msra.mxu0 0.0
    %1786 = vmatprep.subr.mxu0 0.0
    %1787 = vmatpush1.msra.mxu0 0.0
    %1788 = vmatprep.subr.mxu0 0.0
    %1789 = vmatpush1.msra.mxu0 0.0
    %1790 = vmatprep.subr.mxu0 0.0
    %1791 = vmatpush1.msra.mxu0 0.0
    %1792 = vmatprep.subr.mxu0 0.0
    %1793 = vmatpush1.msra.mxu0 0.0
    %1794 = vmatprep.subr.mxu0 0.0
    %1795 = vmatpush1.msra.mxu0 0.0
    %1796 = vmatprep.subr.mxu0 0.0
    %1797 = vmatpush1.msra.mxu0 0.0
    %1798 = vmatprep.subr.mxu0 0.0
    %1799 = vmatpush1.msra.mxu0 0.0
    %1800 = vmatprep.subr.mxu0 0.0
    %1801 = vmatpush1.msra.mxu0 0.0
    %1802 = vmatprep.subr.mxu0 0.0
    %1803 = vmatpush1.msra.mxu0 0.0
    %1804 = vmatprep.subr.mxu0 0.0
    %1805 = vmatpush1.msra.mxu0 0.0
    %1806 = vmatprep.subr.mxu0 0.0
    %1807 = vmatpush1.msra.mxu0 0.0
    %1808 = vmatprep.subr.mxu0 0.0
    %1809 = vmatpush1.msra.mxu0 0.0
    %1810 = vmatprep.subr.mxu0 0.0
    %1811 = vmatpush1.msra.mxu0 0.0
    %1812 = vmatprep.subr.mxu0 0.0
    %1813 = vmatpush1.msra.mxu0 0.0
    %1814 = vmatprep.subr.mxu0 0.0
    %1815 = vmatpush1.msra.mxu0 0.0
    %1816 = vmatprep.subr.mxu0 0.0
    %1817 = vmatpush1.msra.mxu0 0.0
    %1818 = vmatprep.subr.mxu0 0.0
    %1819 = vmatpush1.msra.mxu0 0.0
    %1820 = vmatprep.subr.mxu0 0.0
    %1821 = vmatpush1.msra.mxu0 0.0
    %1822 = vmatprep.subr.mxu0 0.0
    %1823 = vmatpush1.msra.mxu0 0.0
    %1824 = vmatprep.subr.mxu0 0.0
    %1825 = vmatpush1.msra.mxu0 0.0
    %1826 = vmatprep.subr.mxu0 0.0
    %1827 = vmatpush1.msra.mxu0 0.0
    %1828 = vmatprep.subr.mxu0 0.0
    %1829 = vmatpush1.msra.mxu0 0.0
    %1830 = vmatprep.subr.mxu0 0.0
    %1831 = vmatpush1.msra.mxu0 0.0
    %1832 = vmatprep.subr.mxu0 0.0
    %1833 = vmatpush1.msra.mxu0 0.0
    %1834 = vmatprep.subr.mxu0 0.0
    %1835 = vmatpush1.msra.mxu0 0.0
    %1836 = vmatprep.subr.mxu0 0.0
    %1837 = vmatpush1.msra.mxu0 0.0
    %1838 = vmatprep.mubr.f32.mxu0 0.0
    %1839 = vmatmul.mubr.f32.gmra.mrb[0].mxu0 %v1772
    %v1840 = vpop.f32.mrb[0].mxu0
    %v1841 = vadd.f32 0.0, %v1840
    %v1842 = vpop.f32.mrb[0].mxu0
    %1843 = vdwg.mxu0
    %v1845 = vrot.slane %v1841, 2
    %v1847 = vadd.f32 %v189, %v1845
    %v1849 = vrot.slane %v1767, 2
    %1850 = vrot.lane.b32.xlu0 %v1849, 80
    %v1851 = vpop.permute.xlu0 %1850
    %v1852 = vsel %vm284, %v1851, 0
    %1854 = vmatprep.subr.mxu0 0.0
    %1855 = vmatpush1.msra.mxu0 %v95
    %1856 = vmatprep.subr.mxu0 0.0
    %1857 = vmatpush1.msra.mxu0 %v96
    %1858 = vmatprep.subr.mxu0 0.0
    %1859 = vmatpush1.msra.mxu0 0.0
    %1860 = vmatprep.subr.mxu0 0.0
    %1861 = vmatpush1.msra.mxu0 0.0
    %1862 = vmatprep.subr.mxu0 0.0
    %1863 = vmatpush1.msra.mxu0 0.0
    %1864 = vmatprep.subr.mxu0 0.0
    %1865 = vmatpush1.msra.mxu0 0.0
    %1866 = vmatprep.subr.mxu0 0.0
    %1867 = vmatpush1.msra.mxu0 0.0
    %1868 = vmatprep.subr.mxu0 0.0
    %1869 = vmatpush1.msra.mxu0 0.0
    %1870 = vmatprep.subr.mxu0 0.0
    %1871 = vmatpush1.msra.mxu0 0.0
    %1872 = vmatprep.subr.mxu0 0.0
    %1873 = vmatpush1.msra.mxu0 0.0
    %1874 = vmatprep.subr.mxu0 0.0
    %1875 = vmatpush1.msra.mxu0 0.0
    %1876 = vmatprep.subr.mxu0 0.0
    %1877 = vmatpush1.msra.mxu0 0.0
    %1878 = vmatprep.subr.mxu0 0.0
    %1879 = vmatpush1.msra.mxu0 0.0
    %1880 = vmatprep.subr.mxu0 0.0
    %1881 = vmatpush1.msra.mxu0 0.0
    %1882 = vmatprep.subr.mxu0 0.0
    %1883 = vmatpush1.msra.mxu0 0.0
    %1884 = vmatprep.subr.mxu0 0.0
    %1885 = vmatpush1.msra.mxu0 0.0
    %1886 = vmatprep.subr.mxu0 0.0
    %1887 = vmatpush1.msra.mxu0 0.0
    %1888 = vmatprep.subr.mxu0 0.0
    %1889 = vmatpush1.msra.mxu0 0.0
    %1890 = vmatprep.subr.mxu0 0.0
    %1891 = vmatpush1.msra.mxu0 0.0
    %1892 = vmatprep.subr.mxu0 0.0
    %1893 = vmatpush1.msra.mxu0 0.0
    %1894 = vmatprep.subr.mxu0 0.0
    %1895 = vmatpush1.msra.mxu0 0.0
    %1896 = vmatprep.subr.mxu0 0.0
    %1897 = vmatpush1.msra.mxu0 0.0
    %1898 = vmatprep.subr.mxu0 0.0
    %1899 = vmatpush1.msra.mxu0 0.0
    %1900 = vmatprep.subr.mxu0 0.0
    %1901 = vmatpush1.msra.mxu0 0.0
    %1902 = vmatprep.subr.mxu0 0.0
    %1903 = vmatpush1.msra.mxu0 0.0
    %1904 = vmatprep.subr.mxu0 0.0
    %1905 = vmatpush1.msra.mxu0 0.0
    %1906 = vmatprep.subr.mxu0 0.0
    %1907 = vmatpush1.msra.mxu0 0.0
    %1908 = vmatprep.subr.mxu0 0.0
    %1909 = vmatpush1.msra.mxu0 0.0
    %1910 = vmatprep.subr.mxu0 0.0
    %1911 = vmatpush1.msra.mxu0 0.0
    %1912 = vmatprep.subr.mxu0 0.0
    %1913 = vmatpush1.msra.mxu0 0.0
    %1914 = vmatprep.subr.mxu0 0.0
    %1915 = vmatpush1.msra.mxu0 0.0
    %1916 = vmatprep.subr.mxu0 0.0
    %1917 = vmatpush1.msra.mxu0 0.0
    %1918 = vmatprep.mubr.f32.mxu0 0.0
    %1919 = vmatmul.mubr.f32.gmra.mrb[0].mxu0 %v1852
    %v1920 = vpop.f32.mrb[0].mxu0
    %v1921 = vadd.f32 0.0, %v1920
    %v1922 = vpop.f32.mrb[0].mxu0
    %1923 = vdwg.mxu0
    %v1924 = vadd.f32 %v270, %v1921
    %v1925 = vxor.u32 %v1847, 2147483648
    %v1926 = vmul.f32 %v1925, 1.442695
    %v1927 = vpow.pop %v1926
    %v1928 = vadd.f32 %v1927, 1.0
    %v1929 = vrcp.pop %v1928
    %v1930 = vmul.f32 1.0, %v1929
    %v1931 = vtanh.pop %v1847
    %v1933 = vrot.slane %v1734, 6
    %v1935 = vmul.f32 %v1930, %v1933
    %1937 = vrot.lane.b32.xlu0 %v1931, 96
    %v1938 = vpop.permute.xlu0 %1937
    %v1940 = vmul.f32 %v1930, %v1938
    %1942 = vrot.lane.b32.xlu0 %v1940, 16
    %v1943 = vpop.permute.xlu0 %1942
    %v1945 = vadd.f32 %v1935, %v1943
    %v1946 = vtanh.pop %v1945
    %1948 = vrot.lane.b32.xlu0 %v1946, 32
    %v1949 = vpop.permute.xlu0 %1948
    %v1951 = vmul.f32 %v1930, %v1949
    %v1952 = vxor.u32 %v1924, 2147483648
    %v1953 = vmul.f32 %v1952, 1.442695
    %v1954 = vpow.pop %v1953
    %v1955 = vadd.f32 %v1954, 1.0
    %v1956 = vrcp.pop %v1955
    %v1957 = vmul.f32 1.0, %v1956
    %v1958 = vtanh.pop %v1924
    %v1960 = vrot.slane %v1761, 2
    %v1962 = vmul.f32 %v1957, %v1960
    %1964 = vrot.lane.b32.xlu0 %v1958, 96
    %v1965 = vpop.permute.xlu0 %1964
    %v1967 = vmul.f32 %v1957, %v1965
    %1969 = vrot.lane.b32.xlu0 %v1967, 16
    %v1970 = vpop.permute.xlu0 %1969
    %v1972 = vadd.f32 %v1962, %v1970
    %v1973 = vtanh.pop %v1972
    %1975 = vrot.lane.b32.xlu0 %v1973, 32
    %v1976 = vpop.permute.xlu0 %1975
    %v1978 = vmul.f32 %v1957, %v1976
    %v1979 = vrot.slane %v678, 1
    %v1981 = vrot.slane %v892, 2
    %v1983 = vrot.slane %v1103, 3
    %v1985 = vrot.slane %v1313, 4
    %v1987 = vrot.slane %v1526, 5
    %v1989 = vrot.slane %v1740, 6
    %v1992 = vrot.slane %v1951, 7
    %v1994 = vrot.slane %v463, 1
    %v1997 = vrot.slane %v892, 3
    %v1999 = vrot.slane %v1103, 4
    %v2001 = vrot.slane %v1313, 5
    %v2003 = vrot.slane %v1526, 6
    %v2005 = vrot.slane %v1740, 7
    %vm2007 = vcmask 1040384
    %v2008 = vsel %vm2007, %v463, %v1979
    %vm2009 = vcmask 1041408
    %v2010 = vsel %vm2009, %v2008, %v1981
    %vm2011 = vcmask 1042432
    %v2012 = vsel %vm2011, %v2010, %v1983
    %vm2013 = vcmask 1043456
    %v2014 = vsel %vm2013, %v2012, %v1985
    %vm2015 = vcmask 1044480
    %v2016 = vsel %vm2015, %v2014, %v1987
    %vm2017 = vcmask 1045504
    %v2018 = vsel %vm2017, %v2016, %v1989
    %vm2019 = vcmask 1046528
    %v2020 = vsel %vm2019, %v2018, %v1992
    %v2021 = vsel %vm2007, %v1994, %v707
    %v2022 = vsel %vm2009, %v2021, %v1997
    %v2023 = vsel %vm2011, %v2022, %v1999
    %v2024 = vsel %vm2013, %v2023, %v2001
    %v2025 = vsel %vm2015, %v2024, %v2003
    %v2026 = vsel %vm2017, %v2025, %v2005
    %v2027 = vsel %vm2019, %v2026, %v1951
    %v2028 = vrot.slane %v1767, 1
    %v2030 = vrot.slane %v1553, 2
    %v2032 = vrot.slane %v1340, 3
    %v2034 = vrot.slane %v1130, 4
    %v2036 = vrot.slane %v919, 5
    %v2038 = vrot.slane %v705, 6
    %v2040 = vrot.slane %v492, 7
    %v2043 = vrot.slane %v1978, 1
    %v2046 = vrot.slane %v1553, 3
    %v2048 = vrot.slane %v1340, 4
    %v2050 = vrot.slane %v1130, 5
    %v2052 = vrot.slane %v919, 6
    %v2054 = vrot.slane %v705, 7
    %v2056 = vsel %vm2007, %v1978, %v2028
    %v2057 = vsel %vm2009, %v2056, %v2030
    %v2058 = vsel %vm2011, %v2057, %v2032
    %v2059 = vsel %vm2013, %v2058, %v2034
    %v2060 = vsel %vm2015, %v2059, %v2036
    %v2061 = vsel %vm2017, %v2060, %v2038
    %v2062 = vsel %vm2019, %v2061, %v2040
    %v2063 = vsel %vm2007, %v2043, %v1849
    %v2064 = vsel %vm2009, %v2063, %v2046
    %v2065 = vsel %vm2011, %v2064, %v2048
    %v2066 = vsel %vm2013, %v2065, %v2050
    %v2067 = vsel %vm2015, %v2066, %v2052
    %v2068 = vsel %vm2017, %v2067, %v2054
    %v2069 = vsel %vm2019, %v2068, %v492
    %v2070 = vld [vmem:[%s9] sm:$0xff]
    %v2071 = vld [vmem:[%s9 + $0x8] sm:$0xff]
    %v2072 = vld [vmem:[%s9 + $0x10] sm:$0xff]
    %v2073 = vld [vmem:[%s9 + $0x18] sm:$0xff]
    %2076 = vrot.lane.b32.xlu0 %v2062, 80
    %v2077 = vpop.permute.xlu0 %2076
    %2078 = vrot.lane.b32.xlu0 %v2069, 80
    %v2079 = vpop.permute.xlu0 %2078
    %v2080 = vsel %vm284, %v2077, 0
    %v2082 = vsel %vm284, %v2079, 0
    %2084 = vmatprep.subr.mxu0 0.0
    %2085 = vmatpush1.msra.mxu0 %v2072
    %2086 = vmatprep.subr.mxu0 0.0
    %2087 = vmatpush1.msra.mxu0 %v2073
    %2088 = vmatprep.subr.mxu0 0.0
    %2089 = vmatpush1.msra.mxu0 0.0
    %2090 = vmatprep.subr.mxu0 0.0
    %2091 = vmatpush1.msra.mxu0 0.0
    %2092 = vmatprep.subr.mxu0 0.0
    %2093 = vmatpush1.msra.mxu0 0.0
    %2094 = vmatprep.subr.mxu0 0.0
    %2095 = vmatpush1.msra.mxu0 0.0
    %2096 = vmatprep.subr.mxu0 0.0
    %2097 = vmatpush1.msra.mxu0 0.0
    %2098 = vmatprep.subr.mxu0 0.0
    %2099 = vmatpush1.msra.mxu0 0.0
    %2100 = vmatprep.subr.mxu0 0.0
    %2101 = vmatpush1.msra.mxu0 0.0
    %2102 = vmatprep.subr.mxu0 0.0
    %2103 = vmatpush1.msra.mxu0 0.0
    %2104 = vmatprep.subr.mxu0 0.0
    %2105 = vmatpush1.msra.mxu0 0.0
    %2106 = vmatprep.subr.mxu0 0.0
    %2107 = vmatpush1.msra.mxu0 0.0
    %2108 = vmatprep.subr.mxu0 0.0
    %2109 = vmatpush1.msra.mxu0 0.0
    %2110 = vmatprep.subr.mxu0 0.0
    %2111 = vmatpush1.msra.mxu0 0.0
    %2112 = vmatprep.subr.mxu0 0.0
    %2113 = vmatpush1.msra.mxu0 0.0
    %2114 = vmatprep.subr.mxu0 0.0
    %2115 = vmatpush1.msra.mxu0 0.0
    %2116 = vmatprep.subr.mxu0 0.0
    %2117 = vmatpush1.msra.mxu0 0.0
    %2118 = vmatprep.subr.mxu0 0.0
    %2119 = vmatpush1.msra.mxu0 0.0
    %2120 = vmatprep.subr.mxu0 0.0
    %2121 = vmatpush1.msra.mxu0 0.0
    %2122 = vmatprep.subr.mxu0 0.0
    %2123 = vmatpush1.msra.mxu0 0.0
    %2124 = vmatprep.subr.mxu0 0.0
    %2125 = vmatpush1.msra.mxu0 0.0
    %2126 = vmatprep.subr.mxu0 0.0
    %2127 = vmatpush1.msra.mxu0 0.0
    %2128 = vmatprep.subr.mxu0 0.0
    %2129 = vmatpush1.msra.mxu0 0.0
    %2130 = vmatprep.subr.mxu0 0.0
    %2131 = vmatpush1.msra.mxu0 0.0
    %2132 = vmatprep.subr.mxu0 0.0
    %2133 = vmatpush1.msra.mxu0 0.0
    %2134 = vmatprep.subr.mxu0 0.0
    %2135 = vmatpush1.msra.mxu0 0.0
    %2136 = vmatprep.subr.mxu0 0.0
    %2137 = vmatpush1.msra.mxu0 0.0
    %2138 = vmatprep.subr.mxu0 0.0
    %2139 = vmatpush1.msra.mxu0 0.0
    %2140 = vmatprep.subr.mxu0 0.0
    %2141 = vmatpush1.msra.mxu0 0.0
    %2142 = vmatprep.subr.mxu0 0.0
    %2143 = vmatpush1.msra.mxu0 0.0
    %2144 = vmatprep.subr.mxu0 0.0
    %2145 = vmatpush1.msra.mxu0 0.0
    %2146 = vmatprep.subr.mxu0 0.0
    %2147 = vmatpush1.msra.mxu0 0.0
    %2148 = vmatprep.mubr.f32.mxu0 0.0
    %2149 = vmatmul.mubr.f32.gmra.mrb[0].mxu0 %v2080
    %v2150 = vpop.f32.mrb[0].mxu0
    %v2151 = vadd.f32 0.0, %v2150
    %v2152 = vpop.f32.mrb[0].mxu0
    %2153 = vmatprep.mubr.f32.mxu0 0.0
    %2154 = vmatmul.mubr.f32.gmra.mrb[0].mxu0 %v2082
    %v2155 = vpop.f32.mrb[0].mxu0
    %v2156 = vadd.f32 0.0, %v2155
    %v2157 = vpop.f32.mrb[0].mxu0
    %2158 = vdwg.mxu0
    %2161 = vrot.lane.b32.xlu0 %v2020, 80
    %v2162 = vpop.permute.xlu0 %2161
    %2163 = vrot.lane.b32.xlu0 %v2027, 80
    %v2164 = vpop.permute.xlu0 %2163
    %v2165 = vsel %vm284, %v2162, 0
    %v2167 = vsel %vm284, %v2164, 0
    %2169 = vmatprep.subr.mxu0 0.0
    %2170 = vmatpush1.msra.mxu0 %v2070
    %2171 = vmatprep.subr.mxu0 0.0
    %2172 = vmatpush1.msra.mxu0 %v2071
    %2173 = vmatprep.subr.mxu0 0.0
    %2174 = vmatpush1.msra.mxu0 0.0
    %2175 = vmatprep.subr.mxu0 0.0
    %2176 = vmatpush1.msra.mxu0 0.0
    %2177 = vmatprep.subr.mxu0 0.0
    %2178 = vmatpush1.msra.mxu0 0.0
    %2179 = vmatprep.subr.mxu0 0.0
    %2180 = vmatpush1.msra.mxu0 0.0
    %2181 = vmatprep.subr.mxu0 0.0
    %2182 = vmatpush1.msra.mxu0 0.0
    %2183 = vmatprep.subr.mxu0 0.0
    %2184 = vmatpush1.msra.mxu0 0.0
    %2185 = vmatprep.subr.mxu0 0.0
    %2186 = vmatpush1.msra.mxu0 0.0
    %2187 = vmatprep.subr.mxu0 0.0
    %2188 = vmatpush1.msra.mxu0 0.0
    %2189 = vmatprep.subr.mxu0 0.0
    %2190 = vmatpush1.msra.mxu0 0.0
    %2191 = vmatprep.subr.mxu0 0.0
    %2192 = vmatpush1.msra.mxu0 0.0
    %2193 = vmatprep.subr.mxu0 0.0
    %2194 = vmatpush1.msra.mxu0 0.0
    %2195 = vmatprep.subr.mxu0 0.0
    %2196 = vmatpush1.msra.mxu0 0.0
    %2197 = vmatprep.subr.mxu0 0.0
    %2198 = vmatpush1.msra.mxu0 0.0
    %2199 = vmatprep.subr.mxu0 0.0
    %2200 = vmatpush1.msra.mxu0 0.0
    %2201 = vmatprep.subr.mxu0 0.0
    %2202 = vmatpush1.msra.mxu0 0.0
    %2203 = vmatprep.subr.mxu0 0.0
    %2204 = vmatpush1.msra.mxu0 0.0
    %2205 = vmatprep.subr.mxu0 0.0
    %2206 = vmatpush1.msra.mxu0 0.0
    %2207 = vmatprep.subr.mxu0 0.0
    %2208 = vmatpush1.msra.mxu0 0.0
    %2209 = vmatprep.subr.mxu0 0.0
    %2210 = vmatpush1.msra.mxu0 0.0
    %2211 = vmatprep.subr.mxu0 0.0
    %2212 = vmatpush1.msra.mxu0 0.0
    %2213 = vmatprep.subr.mxu0 0.0
    %2214 = vmatpush1.msra.mxu0 0.0
    %2215 = vmatprep.subr.mxu0 0.0
    %2216 = vmatpush1.msra.mxu0 0.0
    %2217 = vmatprep.subr.mxu0 0.0
    %2218 = vmatpush1.msra.mxu0 0.0
    %2219 = vmatprep.subr.mxu0 0.0
    %2220 = vmatpush1.msra.mxu0 0.0
    %2221 = vmatprep.subr.mxu0 0.0
    %2222 = vmatpush1.msra.mxu0 0.0
    %2223 = vmatprep.subr.mxu0 0.0
    %2224 = vmatpush1.msra.mxu0 0.0
    %2225 = vmatprep.subr.mxu0 0.0
    %2226 = vmatpush1.msra.mxu0 0.0
    %2227 = vmatprep.subr.mxu0 0.0
    %2228 = vmatpush1.msra.mxu0 0.0
    %2229 = vmatprep.subr.mxu0 0.0
    %2230 = vmatpush1.msra.mxu0 0.0
    %2231 = vmatprep.subr.mxu0 0.0
    %2232 = vmatpush1.msra.mxu0 0.0
    %2233 = vmatprep.mubr.f32.mxu0 0.0
    %2234 = vmatmul.mubr.f32.gmra.mrb[0].mxu0 %v2165
    %v2235 = vpop.f32.mrb[0].mxu0
    %v2236 = vadd.f32 %v2151, %v2235
    %v2237 = vpop.f32.mrb[0].mxu0
    %2238 = vmatprep.mubr.f32.mxu0 0.0
    %2239 = vmatmul.mubr.f32.gmra.mrb[0].mxu0 %v2167
    %v2240 = vpop.f32.mrb[0].mxu0
    %v2241 = vadd.f32 %v2156, %v2240
    %v2242 = vpop.f32.mrb[0].mxu0
    %2243 = vdwg.mxu0
    %v2244 = vld [vmem:[%s10] sm:$0x1]
    %v2246 = vlaneseq
    %v2247 = vshrl.u32 %v2246, 7
    %v2248 = vsub.s32 0, %v2247
    %v2249 = vrot.slane %v2244, %v2248
    %v2251 = vadd.f32 %v2236, %v2249
    %v2252 = vadd.f32 %v2241, %v2249
    %vm2253 = vcmask 39936
    %2254 = vst.msk [vmem:[%s11] sm:$0xff] %vm2253, %v2251
    %2255 = vst.msk [vmem:[%s11 + $0x8] sm:$0xff] %vm2253, %v2252
    // Predicated region
    $region62: #{tpu_custom_call.1} parent=1 // pred_check
      _
    $region63: #{tpu_custom_call.1} parent=1 // pred_check_branch
      %2257 = sbr.rel (0) target = $region65
    $region64: #{tpu_custom_call.1} parent=1 // pred_region
      _
    $region65: #{tpu_custom_call.1} parent=1 // pred_fallthru
      _
    // Predicated region
    $region66: #{tpu_custom_call.1} parent=1 // pred_check
      _
    $region67: #{tpu_custom_call.1} parent=1 // pred_check_branch
      %2259 = sbr.rel (0) target = $region69
    $region68: #{tpu_custom_call.1} parent=1 // pred_region
      _
    $region69: #{tpu_custom_call.1} parent=1 // pred_fallthru
      _
    %2260 = vsyncpa [#allocation3], 1
    %2261 = vsyncpa [#allocation5], 1
    %2262 = vsyncpa [#allocation8], 1

</llo_original>
